<compile_context>
chip_gen: v7x
topology: tpu7x:2x2x1
jax: 0.10.0
libtpu: 0.0.40
codegen_flags: <defaults>
</compile_context>

<pallas_src>
import jax
import jax.numpy as jnp
from jax.experimental import pallas as pl
from jax.experimental.pallas import tpu as pltpu

OBJ_DIM = 256      # object_feature_dim
SO_DIM = 2 * OBJ_DIM   # packed [subject | object] feature width
SPAT_IN = 10       # spatial input dim
SPAT_HID = 64      # spatial encoder hidden
SPAT_OUT = 32      # spatial_feature_dim
HID = 128          # hidden_dim
NUM_REL = 50       # num_relationships
OUT_PAD = 64       # lane-padded logits width (half the f32 writeback vs 128)

TM_MAX = 1024      # default max batch tile (sweepable)


def relationship_kernel(
    so_ref, spat_ref,
    w_obj2_ref, b_obj2_ref,
    ws1_ref, bs1_ref, ws2_ref, bs2_ref, ws3_ref, bs3_ref,
    wc1ab_ref, wc1c_ref, bc1_ref,
    wc2_ref, bc2_ref, wc3_ref, bc3_ref,
    out_ref,
):
    bf16 = jnp.bfloat16
    relu = lambda x: jnp.maximum(x, 0.0)
    dot = lambda a, b: jnp.dot(a, b, preferred_element_type=jnp.float32)

    # --- object encoder on packed [subj | obj] via block-diagonal weights:
    # [TM,512] @ [512,256] -> already lane-concatenated (subj_enc | obj_enc).
    # Dropout(0.3) = identity in eval mode.
    so_enc = relu(dot(so_ref[...], w_obj2_ref[...]) + b_obj2_ref[...])   # f32 [tm,256]

    # --- spatial encoder: Linear->ReLU->Linear->ReLU->Linear (tiny, un-padded)
    s = relu(dot(spat_ref[...], ws1_ref[...]) + bs1_ref[...])            # f32 [tm,64]
    s = relu(dot(s.astype(bf16), ws2_ref[...]) + bs2_ref[...])           # f32 [tm,64]
    spat_enc = dot(s.astype(bf16), ws3_ref[...]) + bs3_ref[...]          # f32 [tm,32]

    # --- relationship classifier: the K=256 contraction vs merged (wc1a|wc1b)
    # plus the K=32 spatial partial dot is mathematically identical to
    # concat([subj_enc, obj_enc, spat_enc], -1) @ wc1 + bc1.
    h = relu(dot(so_enc.astype(bf16), wc1ab_ref[...])
             + dot(spat_enc.astype(bf16), wc1c_ref[...])
             + bc1_ref[...])                                             # f32 [tm,128]
    h = relu(dot(h.astype(bf16), wc2_ref[...]) + bc2_ref[...])           # f32 [tm,64]
    # final matmul writes 64-lane-padded f32 logits (half the HBM writeback)
    out_ref[...] = dot(h.astype(bf16), wc3_ref[...]) + bc3_ref[...]


def _cdiv(a, b):
    return (a + b - 1) // b


def _round_up(x, m):
    return ((x + m - 1) // m) * m


def _pad_rows(x, n):
    return x if x.shape[0] == n else jnp.pad(x, ((0, n - x.shape[0]), (0, 0)))


def _resident_spec(shape):
    nd = len(shape)
    return pl.BlockSpec(shape, lambda i, _nd=nd: (0,) * _nd)


def _choose_tm(batch, tm_max):
    """16-aligned batch tile; >=2 tiles when the batch is big enough so the
    'parallel' grid axis gives v7x's two TensorCores work; small pad waste."""
    b16 = _round_up(max(batch, 1), 16)
    if b16 <= 32:                      # tiny batch: a single tile
        return b16
    n_tiles = max(2, _cdiv(b16, tm_max))
    return _round_up(_cdiv(b16, n_tiles), 16)


def relationship_classifier(subject_features, object_features, spatial_features,
                            params, *, tm_max=TM_MAX):
    """Batch-tiled Pallas forward. Returns f32 logits of shape (B, NUM_REL)."""
    B = subject_features.shape[0]
    tm = _choose_tm(B, tm_max)
    b_pad = _round_up(B, tm)
    grid = (b_pad // tm,)

    bf16, f32 = jnp.bfloat16, jnp.float32

    # Packed [subj | obj] stream and the spatial stream, bf16, zero-padded rows.
    so = _pad_rows(
        jnp.concatenate([subject_features.astype(bf16),
                         object_features.astype(bf16)], axis=-1), b_pad)      # (b_pad, 512)
    spat = _pad_rows(spatial_features.astype(bf16), b_pad)                    # (b_pad, 10)

    # Block-diagonal object-encoder weight (shared w_obj applied to both halves)
    # and a lane-tiled bias; one dot emits the lane-concatenated encodings.
    w_obj = params["w_obj"].astype(bf16)                                      # (256,128)
    zeros = jnp.zeros_like(w_obj)
    w_obj2 = jnp.concatenate(
        [jnp.concatenate([w_obj, zeros], axis=1),
         jnp.concatenate([zeros, w_obj], axis=1)], axis=0)                    # (512,256)
    b_obj2 = jnp.tile(params["b_obj"].astype(f32), (1, 2))                    # (1,256)

    # Merged classifier-layer-1 weight for the K=256 contraction; logits
    # weight/bias padded to 64 output lanes.
    wc1ab = jnp.concatenate([params["wc1a"], params["wc1b"]], axis=0)         # (256,128)
    wc3_p = jnp.pad(params["wc3"], ((0, 0), (0, OUT_PAD - NUM_REL)))          # (64,64)
    bc3_p = jnp.pad(params["bc3"], ((0, 0), (0, OUT_PAD - NUM_REL)))          # (1,64)

    weight_args = (
        w_obj2, b_obj2,
        params["ws1"].astype(bf16), params["bs1"].astype(f32),
        params["ws2"].astype(bf16), params["bs2"].astype(f32),
        params["ws3"].astype(bf16), params["bs3"].astype(f32),
        wc1ab.astype(bf16), params["wc1c"].astype(bf16), params["bc1"].astype(f32),
        params["wc2"].astype(bf16), params["bc2"].astype(f32),
        wc3_p.astype(bf16), bc3_p.astype(f32),
    )

    act_specs = [
        pl.BlockSpec((tm, SO_DIM), lambda i: (i, 0)),    # packed [subj|obj] tile
        pl.BlockSpec((tm, SPAT_IN), lambda i: (i, 0)),   # spatial tile (full feat dim)
    ]
    w_specs = [_resident_spec(w.shape) for w in weight_args]   # DMA'd once, resident

    out = pl.pallas_call(
        relationship_kernel,
        out_shape=jax.ShapeDtypeStruct((b_pad, OUT_PAD), f32),
        grid_spec=pltpu.PrefetchScalarGridSpec(
            num_scalar_prefetch=0,
            grid=grid,
            in_specs=act_specs + w_specs,
            out_specs=pl.BlockSpec((tm, OUT_PAD), lambda i: (i, 0)),
        ),
        compiler_params=pltpu.CompilerParams(
            dimension_semantics=("parallel",),        # megacore split on v7x
            vmem_limit_bytes=32 * 1024 * 1024,        # guardrail for large TM on v7x
        ),
    )(so, spat, *weight_args)

    # Consumers that accept padded (B, 64) logits can take `out[:B]` directly
    # and skip this lane slice.
    return out[:B, :NUM_REL]


def init_params(key):
    """Deterministic synthetic parameter init (scaled normal)."""
    names_shapes = [
        ("w_obj", (OBJ_DIM, HID)), ("b_obj", (1, HID)),
        ("ws1", (SPAT_IN, SPAT_HID)), ("bs1", (1, SPAT_HID)),
        ("ws2", (SPAT_HID, SPAT_HID)), ("bs2", (1, SPAT_HID)),
        ("ws3", (SPAT_HID, SPAT_OUT)), ("bs3", (1, SPAT_OUT)),
        ("wc1a", (HID, HID)), ("wc1b", (HID, HID)), ("wc1c", (SPAT_OUT, HID)),
        ("bc1", (1, HID)),
        ("wc2", (HID, HID // 2)), ("bc2", (1, HID // 2)),
        ("wc3", (HID // 2, NUM_REL)), ("bc3", (1, NUM_REL)),
    ]
    params = {}
    keys = jax.random.split(key, len(names_shapes))
    for (name, shape), k in zip(names_shapes, keys):
        fan_in = shape[0] if len(shape) == 2 and shape[0] > 1 else 1
        params[name] = (jax.random.normal(k, shape, dtype=jnp.float32)
                        * (1.0 / jnp.sqrt(jnp.float32(max(fan_in, 1)))))
    return params


def reference_forward(subj, obj, spat, p):
    """Pure-JAX reference matching the PyTorch forward (eval mode), with the
    same bf16-matmul / f32-accumulate precision scheme as the kernel."""
    bf16 = jnp.bfloat16
    relu = lambda x: jnp.maximum(x, 0.0)
    mm = lambda a, w: jnp.dot(a.astype(bf16), w.astype(bf16),
                              preferred_element_type=jnp.float32)
    subj_enc = relu(mm(subj, p["w_obj"]) + p["b_obj"])
    obj_enc = relu(mm(obj, p["w_obj"]) + p["b_obj"])
    s = relu(mm(spat, p["ws1"]) + p["bs1"])
    s = relu(mm(s, p["ws2"]) + p["bs2"])
    spat_enc = mm(s, p["ws3"]) + p["bs3"]
    comb = jnp.concatenate([subj_enc, obj_enc, spat_enc], axis=-1)
    wc1 = jnp.concatenate([p["wc1a"], p["wc1b"], p["wc1c"]], axis=0)
    h = relu(mm(comb, wc1) + p["bc1"])
    h = relu(mm(h, p["wc2"]) + p["bc2"])
    return mm(h, p["wc3"]) + p["bc3"]


if __name__ == "__main__":
    key = jax.random.PRNGKey(0)
    k_p, k_s, k_o, k_sp = jax.random.split(key, 4)

    params = init_params(k_p)

    # --- primary small-shape check (single tile, grid=(1,)) ---
    B = 8
    subject_features = jax.random.normal(k_s, (B, OBJ_DIM), dtype=jnp.float32)
    object_features = jax.random.normal(k_o, (B, OBJ_DIM), dtype=jnp.float32)
    spatial_features = jax.random.normal(k_sp, (B, SPAT_IN), dtype=jnp.float32)

    logits = relationship_classifier(subject_features, object_features,
                                     spatial_features, params)
    logits = jax.block_until_ready(logits)
    ref = reference_forward(subject_features, object_features,
                            spatial_features, params)
    assert logits.shape == (B, NUM_REL)
    assert jnp.allclose(logits, ref, atol=1e-2, rtol=1e-2), (
        float(jnp.max(jnp.abs(logits - ref))))

    # --- secondary check exercising multi-tile grid + row padding ---
    B2 = 40
    k_s2, k_o2, k_sp2 = jax.random.split(jax.random.PRNGKey(1), 3)
    subj2 = jax.random.normal(k_s2, (B2, OBJ_DIM), dtype=jnp.float32)
    obj2 = jax.random.normal(k_o2, (B2, OBJ_DIM), dtype=jnp.float32)
    spat2 = jax.random.normal(k_sp2, (B2, SPAT_IN), dtype=jnp.float32)
    logits2 = jax.block_until_ready(
        relationship_classifier(subj2, obj2, spat2, params))
    ref2 = reference_forward(subj2, obj2, spat2, params)
    assert logits2.shape == (B2, NUM_REL)
    assert jnp.allclose(logits2, ref2, atol=1e-2, rtol=1e-2), (
        float(jnp.max(jnp.abs(logits2 - ref2))))

    print("KERNEL_OK")
</pallas_src>

<mosaic_0001>
module attributes {stable_mosaic.version = 11 : i64} {
  func.func @relationship_kernel(%arg0: i32, %arg1: memref<16x512xbf16, #tpu.memory_space<vmem>>, %arg2: memref<16x10xbf16, #tpu.memory_space<vmem>>, %arg3: memref<512x256xbf16, #tpu.memory_space<vmem>>, %arg4: memref<1x256xf32, #tpu.memory_space<vmem>>, %arg5: memref<10x64xbf16, #tpu.memory_space<vmem>>, %arg6: memref<1x64xf32, #tpu.memory_space<vmem>>, %arg7: memref<64x64xbf16, #tpu.memory_space<vmem>>, %arg8: memref<1x64xf32, #tpu.memory_space<vmem>>, %arg9: memref<64x32xbf16, #tpu.memory_space<vmem>>, %arg10: memref<1x32xf32, #tpu.memory_space<vmem>>, %arg11: memref<256x128xbf16, #tpu.memory_space<vmem>>, %arg12: memref<32x128xbf16, #tpu.memory_space<vmem>>, %arg13: memref<1x128xf32, #tpu.memory_space<vmem>>, %arg14: memref<128x64xbf16, #tpu.memory_space<vmem>>, %arg15: memref<1x64xf32, #tpu.memory_space<vmem>>, %arg16: memref<64x64xbf16, #tpu.memory_space<vmem>>, %arg17: memref<1x64xf32, #tpu.memory_space<vmem>>, %arg18: memref<16x64xf32, #tpu.memory_space<vmem>>) attributes {dimension_semantics = [#tpu.dimension_semantics<parallel>], iteration_bounds = array<i64: 1>, scalar_prefetch = 0 : i64, scratch_operands = 0 : i64, tpu.core_type = #tpu.core_type<tc>, window_params = [{transform_indices = @transform_0, window_bounds = array<i64: 16, 512>}, {transform_indices = @transform_1, window_bounds = array<i64: 16, 10>}, {pipeline_mode = #tpu.pipeline_mode<synchronous>, transform_indices = @transform_2, window_bounds = array<i64: 512, 256>}, {pipeline_mode = #tpu.pipeline_mode<synchronous>, transform_indices = @transform_3, window_bounds = array<i64: 1, 256>}, {pipeline_mode = #tpu.pipeline_mode<synchronous>, transform_indices = @transform_4, window_bounds = array<i64: 10, 64>}, {pipeline_mode = #tpu.pipeline_mode<synchronous>, transform_indices = @transform_5, window_bounds = array<i64: 1, 64>}, {pipeline_mode = #tpu.pipeline_mode<synchronous>, transform_indices = @transform_6, window_bounds = array<i64: 64, 64>}, {pipeline_mode = #tpu.pipeline_mode<synchronous>, transform_indices = @transform_7, window_bounds = array<i64: 1, 64>}, {pipeline_mode = #tpu.pipeline_mode<synchronous>, transform_indices = @transform_8, window_bounds = array<i64: 64, 32>}, {pipeline_mode = #tpu.pipeline_mode<synchronous>, transform_indices = @transform_9, window_bounds = array<i64: 1, 32>}, {pipeline_mode = #tpu.pipeline_mode<synchronous>, transform_indices = @transform_10, window_bounds = array<i64: 256, 128>}, {pipeline_mode = #tpu.pipeline_mode<synchronous>, transform_indices = @transform_11, window_bounds = array<i64: 32, 128>}, {pipeline_mode = #tpu.pipeline_mode<synchronous>, transform_indices = @transform_12, window_bounds = array<i64: 1, 128>}, {pipeline_mode = #tpu.pipeline_mode<synchronous>, transform_indices = @transform_13, window_bounds = array<i64: 128, 64>}, {pipeline_mode = #tpu.pipeline_mode<synchronous>, transform_indices = @transform_14, window_bounds = array<i64: 1, 64>}, {pipeline_mode = #tpu.pipeline_mode<synchronous>, transform_indices = @transform_15, window_bounds = array<i64: 64, 64>}, {pipeline_mode = #tpu.pipeline_mode<synchronous>, transform_indices = @transform_16, window_bounds = array<i64: 1, 64>}, {transform_indices = @transform_17, window_bounds = array<i64: 16, 64>}]} {
    %c0 = arith.constant 0 : index
    %c0_0 = arith.constant 0 : index
    %0 = vector.load %arg1[%c0, %c0_0] : memref<16x512xbf16, #tpu.memory_space<vmem>>, vector<16x512xbf16>
    %c0_1 = arith.constant 0 : index
    %c0_2 = arith.constant 0 : index
    %1 = vector.load %arg3[%c0_1, %c0_2] : memref<512x256xbf16, #tpu.memory_space<vmem>>, vector<512x256xbf16>
    %cst = arith.constant dense<0.000000e+00> : vector<16x256xf32>
    %2 = tpu.matmul %0, %1, %cst {dimension_numbers = #tpu.dot_dimension_numbers<[1], [0], [0], [1], [0, 0, 1, 1], [], []>} : vector<16x512xbf16>, vector<512x256xbf16>, vector<16x256xf32> -> vector<16x256xf32>
    %c0_3 = arith.constant 0 : index
    %c0_4 = arith.constant 0 : index
    %3 = vector.load %arg4[%c0_3, %c0_4] : memref<1x256xf32, #tpu.memory_space<vmem>>, vector<1x256xf32>
    %4 = vector.broadcast %3 : vector<1x256xf32> to vector<16x256xf32>
    %5 = arith.addf %2, %4 : vector<16x256xf32>
    %cst_5 = arith.constant 0.000000e+00 : f32
    %6 = vector.broadcast %cst_5 : f32 to vector<16x256xf32>
    %7 = arith.maximumf %5, %6 : vector<16x256xf32>
    %c0_6 = arith.constant 0 : index
    %c0_7 = arith.constant 0 : index
    %8 = vector.load %arg2[%c0_6, %c0_7] : memref<16x10xbf16, #tpu.memory_space<vmem>>, vector<16x10xbf16>
    %c0_8 = arith.constant 0 : index
    %c0_9 = arith.constant 0 : index
    %9 = vector.load %arg5[%c0_8, %c0_9] : memref<10x64xbf16, #tpu.memory_space<vmem>>, vector<10x64xbf16>
    %cst_10 = arith.constant dense<0.000000e+00> : vector<16x64xf32>
    %10 = tpu.matmul %8, %9, %cst_10 {dimension_numbers = #tpu.dot_dimension_numbers<[1], [0], [0], [1], [0, 0, 1, 1], [], []>} : vector<16x10xbf16>, vector<10x64xbf16>, vector<16x64xf32> -> vector<16x64xf32>
    %c0_11 = arith.constant 0 : index
    %c0_12 = arith.constant 0 : index
    %11 = vector.load %arg6[%c0_11, %c0_12] : memref<1x64xf32, #tpu.memory_space<vmem>>, vector<1x64xf32>
    %12 = vector.broadcast %11 : vector<1x64xf32> to vector<16x64xf32>
    %13 = arith.addf %10, %12 : vector<16x64xf32>
    %cst_13 = arith.constant 0.000000e+00 : f32
    %14 = vector.broadcast %cst_13 : f32 to vector<16x64xf32>
    %15 = arith.maximumf %13, %14 : vector<16x64xf32>
    %16 = arith.truncf %15 : vector<16x64xf32> to vector<16x64xbf16>
    %c0_14 = arith.constant 0 : index
    %c0_15 = arith.constant 0 : index
    %17 = vector.load %arg7[%c0_14, %c0_15] : memref<64x64xbf16, #tpu.memory_space<vmem>>, vector<64x64xbf16>
    %cst_16 = arith.constant dense<0.000000e+00> : vector<16x64xf32>
    %18 = tpu.matmul %16, %17, %cst_16 {dimension_numbers = #tpu.dot_dimension_numbers<[1], [0], [0], [1], [0, 0, 1, 1], [], []>} : vector<16x64xbf16>, vector<64x64xbf16>, vector<16x64xf32> -> vector<16x64xf32>
    %c0_17 = arith.constant 0 : index
    %c0_18 = arith.constant 0 : index
    %19 = vector.load %arg8[%c0_17, %c0_18] : memref<1x64xf32, #tpu.memory_space<vmem>>, vector<1x64xf32>
    %20 = vector.broadcast %19 : vector<1x64xf32> to vector<16x64xf32>
    %21 = arith.addf %18, %20 : vector<16x64xf32>
    %cst_19 = arith.constant 0.000000e+00 : f32
    %22 = vector.broadcast %cst_19 : f32 to vector<16x64xf32>
    %23 = arith.maximumf %21, %22 : vector<16x64xf32>
    %24 = arith.truncf %23 : vector<16x64xf32> to vector<16x64xbf16>
    %c0_20 = arith.constant 0 : index
    %c0_21 = arith.constant 0 : index
    %25 = vector.load %arg9[%c0_20, %c0_21] : memref<64x32xbf16, #tpu.memory_space<vmem>>, vector<64x32xbf16>
    %cst_22 = arith.constant dense<0.000000e+00> : vector<16x32xf32>
    %26 = tpu.matmul %24, %25, %cst_22 {dimension_numbers = #tpu.dot_dimension_numbers<[1], [0], [0], [1], [0, 0, 1, 1], [], []>} : vector<16x64xbf16>, vector<64x32xbf16>, vector<16x32xf32> -> vector<16x32xf32>
    %c0_23 = arith.constant 0 : index
    %c0_24 = arith.constant 0 : index
    %27 = vector.load %arg10[%c0_23, %c0_24] : memref<1x32xf32, #tpu.memory_space<vmem>>, vector<1x32xf32>
    %28 = vector.broadcast %27 : vector<1x32xf32> to vector<16x32xf32>
    %29 = arith.addf %26, %28 : vector<16x32xf32>
    %30 = arith.truncf %7 : vector<16x256xf32> to vector<16x256xbf16>
    %c0_25 = arith.constant 0 : index
    %c0_26 = arith.constant 0 : index
    %31 = vector.load %arg11[%c0_25, %c0_26] : memref<256x128xbf16, #tpu.memory_space<vmem>>, vector<256x128xbf16>
    %cst_27 = arith.constant dense<0.000000e+00> : vector<16x128xf32>
    %32 = tpu.matmul %30, %31, %cst_27 {dimension_numbers = #tpu.dot_dimension_numbers<[1], [0], [0], [1], [0, 0, 1, 1], [], []>} : vector<16x256xbf16>, vector<256x128xbf16>, vector<16x128xf32> -> vector<16x128xf32>
    %33 = arith.truncf %29 : vector<16x32xf32> to vector<16x32xbf16>
    %c0_28 = arith.constant 0 : index
    %c0_29 = arith.constant 0 : index
    %34 = vector.load %arg12[%c0_28, %c0_29] : memref<32x128xbf16, #tpu.memory_space<vmem>>, vector<32x128xbf16>
    %cst_30 = arith.constant dense<0.000000e+00> : vector<16x128xf32>
    %35 = tpu.matmul %33, %34, %cst_30 {dimension_numbers = #tpu.dot_dimension_numbers<[1], [0], [0], [1], [0, 0, 1, 1], [], []>} : vector<16x32xbf16>, vector<32x128xbf16>, vector<16x128xf32> -> vector<16x128xf32>
    %36 = arith.addf %32, %35 : vector<16x128xf32>
    %c0_31 = arith.constant 0 : index
    %c0_32 = arith.constant 0 : index
    %37 = vector.load %arg13[%c0_31, %c0_32] : memref<1x128xf32, #tpu.memory_space<vmem>>, vector<1x128xf32>
    %38 = vector.broadcast %37 : vector<1x128xf32> to vector<16x128xf32>
    %39 = arith.addf %36, %38 : vector<16x128xf32>
    %cst_33 = arith.constant 0.000000e+00 : f32
    %40 = vector.broadcast %cst_33 : f32 to vector<16x128xf32>
    %41 = arith.maximumf %39, %40 : vector<16x128xf32>
    %42 = arith.truncf %41 : vector<16x128xf32> to vector<16x128xbf16>
    %c0_34 = arith.constant 0 : index
    %c0_35 = arith.constant 0 : index
    %43 = vector.load %arg14[%c0_34, %c0_35] : memref<128x64xbf16, #tpu.memory_space<vmem>>, vector<128x64xbf16>
    %cst_36 = arith.constant dense<0.000000e+00> : vector<16x64xf32>
    %44 = tpu.matmul %42, %43, %cst_36 {dimension_numbers = #tpu.dot_dimension_numbers<[1], [0], [0], [1], [0, 0, 1, 1], [], []>} : vector<16x128xbf16>, vector<128x64xbf16>, vector<16x64xf32> -> vector<16x64xf32>
    %c0_37 = arith.constant 0 : index
    %c0_38 = arith.constant 0 : index
    %45 = vector.load %arg15[%c0_37, %c0_38] : memref<1x64xf32, #tpu.memory_space<vmem>>, vector<1x64xf32>
    %46 = vector.broadcast %45 : vector<1x64xf32> to vector<16x64xf32>
    %47 = arith.addf %44, %46 : vector<16x64xf32>
    %cst_39 = arith.constant 0.000000e+00 : f32
    %48 = vector.broadcast %cst_39 : f32 to vector<16x64xf32>
    %49 = arith.maximumf %47, %48 : vector<16x64xf32>
    %50 = arith.truncf %49 : vector<16x64xf32> to vector<16x64xbf16>
    %c0_40 = arith.constant 0 : index
    %c0_41 = arith.constant 0 : index
    %51 = vector.load %arg16[%c0_40, %c0_41] : memref<64x64xbf16, #tpu.memory_space<vmem>>, vector<64x64xbf16>
    %cst_42 = arith.constant dense<0.000000e+00> : vector<16x64xf32>
    %52 = tpu.matmul %50, %51, %cst_42 {dimension_numbers = #tpu.dot_dimension_numbers<[1], [0], [0], [1], [0, 0, 1, 1], [], []>} : vector<16x64xbf16>, vector<64x64xbf16>, vector<16x64xf32> -> vector<16x64xf32>
    %c0_43 = arith.constant 0 : index
    %c0_44 = arith.constant 0 : index
    %53 = vector.load %arg17[%c0_43, %c0_44] : memref<1x64xf32, #tpu.memory_space<vmem>>, vector<1x64xf32>
    %54 = vector.broadcast %53 : vector<1x64xf32> to vector<16x64xf32>
    %55 = arith.addf %52, %54 : vector<16x64xf32>
    %c0_45 = arith.constant 0 : index
    %c0_46 = arith.constant 0 : index
    %56 = vector.load %arg18[%c0_45, %c0_46] : memref<16x64xf32, #tpu.memory_space<vmem>>, vector<16x64xf32>
    tpu.vector_store %arg18[%c0_45, %c0_46], %55 {strides = array<i32>} : memref<16x64xf32, #tpu.memory_space<vmem>>, vector<16x64xf32>,
    return
  }
  func.func @transform_0(%arg0: i32) -> (i32, i32) {
    %c0_i32 = arith.constant 0 : i32
    %c0_i32_0 = arith.constant 0 : i32
    return %arg0, %c0_i32 : i32, i32
  }
  func.func @transform_1(%arg0: i32) -> (i32, i32) {
    %c0_i32 = arith.constant 0 : i32
    %c0_i32_0 = arith.constant 0 : i32
    return %arg0, %c0_i32 : i32, i32
  }
  func.func @transform_2(%arg0: i32) -> (i32, i32) {
    %c0_i32 = arith.constant 0 : i32
    %c0_i32_0 = arith.constant 0 : i32
    %c0_i32_1 = arith.constant 0 : i32
    return %c0_i32, %c0_i32_0 : i32, i32
  }
  func.func @transform_3(%arg0: i32) -> (i32, i32) {
    %c0_i32 = arith.constant 0 : i32
    %c0_i32_0 = arith.constant 0 : i32
    %c0_i32_1 = arith.constant 0 : i32
    return %c0_i32, %c0_i32_0 : i32, i32
  }
  func.func @transform_4(%arg0: i32) -> (i32, i32) {
    %c0_i32 = arith.constant 0 : i32
    %c0_i32_0 = arith.constant 0 : i32
    %c0_i32_1 = arith.constant 0 : i32
    return %c0_i32, %c0_i32_0 : i32, i32
  }
  func.func @transform_5(%arg0: i32) -> (i32, i32) {
    %c0_i32 = arith.constant 0 : i32
    %c0_i32_0 = arith.constant 0 : i32
    %c0_i32_1 = arith.constant 0 : i32
    return %c0_i32, %c0_i32_0 : i32, i32
  }
  func.func @transform_6(%arg0: i32) -> (i32, i32) {
    %c0_i32 = arith.constant 0 : i32
    %c0_i32_0 = arith.constant 0 : i32
    %c0_i32_1 = arith.constant 0 : i32
    return %c0_i32, %c0_i32_0 : i32, i32
  }
  func.func @transform_7(%arg0: i32) -> (i32, i32) {
    %c0_i32 = arith.constant 0 : i32
    %c0_i32_0 = arith.constant 0 : i32
    %c0_i32_1 = arith.constant 0 : i32
    return %c0_i32, %c0_i32_0 : i32, i32
  }
  func.func @transform_8(%arg0: i32) -> (i32, i32) {
    %c0_i32 = arith.constant 0 : i32
    %c0_i32_0 = arith.constant 0 : i32
    %c0_i32_1 = arith.constant 0 : i32
    return %c0_i32, %c0_i32_0 : i32, i32
  }
  func.func @transform_9(%arg0: i32) -> (i32, i32) {
    %c0_i32 = arith.constant 0 : i32
    %c0_i32_0 = arith.constant 0 : i32
    %c0_i32_1 = arith.constant 0 : i32
    return %c0_i32, %c0_i32_0 : i32, i32
  }
  func.func @transform_10(%arg0: i32) -> (i32, i32) {
    %c0_i32 = arith.constant 0 : i32
    %c0_i32_0 = arith.constant 0 : i32
    %c0_i32_1 = arith.constant 0 : i32
    return %c0_i32, %c0_i32_0 : i32, i32
  }
  func.func @transform_11(%arg0: i32) -> (i32, i32) {
    %c0_i32 = arith.constant 0 : i32
    %c0_i32_0 = arith.constant 0 : i32
    %c0_i32_1 = arith.constant 0 : i32
    return %c0_i32, %c0_i32_0 : i32, i32
  }
  func.func @transform_12(%arg0: i32) -> (i32, i32) {
    %c0_i32 = arith.constant 0 : i32
    %c0_i32_0 = arith.constant 0 : i32
    %c0_i32_1 = arith.constant 0 : i32
    return %c0_i32, %c0_i32_0 : i32, i32
  }
  func.func @transform_13(%arg0: i32) -> (i32, i32) {
    %c0_i32 = arith.constant 0 : i32
    %c0_i32_0 = arith.constant 0 : i32
    %c0_i32_1 = arith.constant 0 : i32
    return %c0_i32, %c0_i32_0 : i32, i32
  }
  func.func @transform_14(%arg0: i32) -> (i32, i32) {
    %c0_i32 = arith.constant 0 : i32
    %c0_i32_0 = arith.constant 0 : i32
    %c0_i32_1 = arith.constant 0 : i32
    return %c0_i32, %c0_i32_0 : i32, i32
  }
  func.func @transform_15(%arg0: i32) -> (i32, i32) {
    %c0_i32 = arith.constant 0 : i32
    %c0_i32_0 = arith.constant 0 : i32
    %c0_i32_1 = arith.constant 0 : i32
    return %c0_i32, %c0_i32_0 : i32, i32
  }
  func.func @transform_16(%arg0: i32) -> (i32, i32) {
    %c0_i32 = arith.constant 0 : i32
    %c0_i32_0 = arith.constant 0 : i32
    %c0_i32_1 = arith.constant 0 : i32
    return %c0_i32, %c0_i32_0 : i32, i32
  }
  func.func @transform_17(%arg0: i32) -> (i32, i32) {
    %c0_i32 = arith.constant 0 : i32
    %c0_i32_0 = arith.constant 0 : i32
    return %arg0, %c0_i32 : i32, i32
  }
}

</mosaic_0001>

<llo_original>
// kernel: tpu_custom_call.1
$region0: #{tpu_custom_call.1}
  #allocation0 [shape = 'u32[]', space=smem, size = 0x4, offset = 0x4, fixed_abs, tag = 'smem constant byte address 0x4 - core index']
  #allocation1 [shape = 'u32[144,128]{1,0:T(1,128)}', space=vmem, size = 0x12000, scoped, tag = 'internal scratch']
  %s0 = inlined_call_operand.vmem [shape: bf16[16,512], index: 0, kind: input, shape index: {}]
  %s1 = inlined_call_operand.hbm [shape: bf16[16,10], index: 1, kind: input, shape index: {}]
  %s2 = inlined_call_operand.hbm [shape: bf16[512,256], index: 2, kind: input, shape index: {}]
  %s3 = inlined_call_operand.hbm [shape: f32[1,256], index: 3, kind: input, shape index: {}]
  %s4 = inlined_call_operand.hbm [shape: bf16[10,64], index: 4, kind: input, shape index: {}]
  %s5 = inlined_call_operand.vmem [shape: f32[1,64], index: 5, kind: input, shape index: {}]
  %s6 = inlined_call_operand.hbm [shape: bf16[64,64], index: 6, kind: input, shape index: {}]
  %s7 = inlined_call_operand.hbm [shape: f32[1,64], index: 7, kind: input, shape index: {}]
  %s8 = inlined_call_operand.vmem [shape: bf16[64,32], index: 8, kind: input, shape index: {}]
  %s9 = inlined_call_operand.hbm [shape: f32[1,32], index: 9, kind: input, shape index: {}]
  %s10 = inlined_call_operand.vmem [shape: bf16[256,128], index: 10, kind: input, shape index: {}]
  %s11 = inlined_call_operand.hbm [shape: bf16[32,128], index: 11, kind: input, shape index: {}]
  %s12 = inlined_call_operand.hbm [shape: f32[1,128], index: 12, kind: input, shape index: {}]
  %s13 = inlined_call_operand.vmem [shape: bf16[128,64], index: 13, kind: input, shape index: {}]
  %s14 = inlined_call_operand.vmem [shape: f32[1,64], index: 14, kind: input, shape index: {}]
  %s15 = inlined_call_operand.vmem [shape: bf16[64,64], index: 15, kind: input, shape index: {}]
  %s16 = inlined_call_operand.vmem [shape: f32[1,64], index: 16, kind: input, shape index: {}]
  %s17 = inlined_call_operand.hbm [shape: f32[16,64], index: 17, kind: output, shape index: {}]
  %s18 = sld [smem:[#allocation0]]
  $region114: #{tpu_custom_call.1} parent=0
    _
  %s20 = ssub.s32 1, %s18
  %s21 = scalar_select 0, %s20, %s18
  $region1: #{tpu_custom_call.1} parent=0
    #allocation2 [shape = 'u8[4096]{0}', space=vmem, size = 0x1000, scoped, tag = 'input window, operand 1, single buffered']
    #allocation3 [shape = 's32[1]{0}', space=sflag, size = 0x4, scoped, tag = 'scoped memory for tpu_custom_call.1']
    #allocation4 [shape = 's32[1]{0}', space=sflag, size = 0x4, scoped, tag = 'scoped memory for tpu_custom_call.1']
    #allocation5 [shape = 'u8[262144]{0}', space=vmem, size = 0x40000, scoped, tag = 'input window, operand 2, single buffered']
    #allocation6 [shape = 's32[1]{0}', space=sflag, size = 0x4, scoped, tag = 'scoped memory for tpu_custom_call.1']
    #allocation7 [shape = 'u8[1024]{0}', space=vmem, size = 0x400, scoped, tag = 'input window, operand 3, single buffered']
    #allocation8 [shape = 'u8[4096]{0}', space=vmem, size = 0x1000, scoped, tag = 'input window, operand 4, single buffered']
    #allocation9 [shape = 's32[1]{0}', space=sflag, size = 0x4, scoped, tag = 'scoped memory for tpu_custom_call.1']
    #allocation10 [shape = 'u8[16384]{0}', space=vmem, size = 0x4000, scoped, tag = 'input window, operand 6, single buffered']
    #allocation11 [shape = 'u8[512]{0}', space=vmem, size = 0x400, scoped, tag = 'input window, operand 7, single buffered']
    #allocation12 [shape = 's32[1]{0}', space=sflag, size = 0x4, scoped, tag = 'scoped memory for tpu_custom_call.1']
    #allocation13 [shape = 'u8[512]{0}', space=vmem, size = 0x400, scoped, tag = 'input window, operand 9, single buffered']
    #allocation14 [shape = 'u8[8192]{0}', space=vmem, size = 0x2000, scoped, tag = 'input window, operand 11, single buffered']
    #allocation15 [shape = 's32[1]{0}', space=sflag, size = 0x4, scoped, tag = 'scoped memory for tpu_custom_call.1']
    #allocation16 [shape = 'u8[512]{0}', space=vmem, size = 0x400, scoped, tag = 'input window, operand 12, single buffered']
    #allocation17 [shape = 'u8[8192]{0}', space=vmem, size = 0x2000, scoped, tag = 'output window, operand 0, single buffered']
    %22 = vsyncpa [#allocation3], 0
    %23 = vsyncpa [#allocation6], 0
    %24 = vsyncpa [#allocation9], 0
    %25 = vsyncpa [#allocation12], 0
    %26 = vsyncpa [#allocation15], 0
    %27 = vsyncpa [#allocation4], 0
    // Predicated region
    $region2: #{tpu_custom_call.1} parent=1 // pred_check
      _
    $region3: #{tpu_custom_call.1} parent=1 // pred_check_branch
      %29 = sbr.rel (0) target = $region5
    $region4: #{tpu_custom_call.1} parent=1 // pred_region
      _
    $region5: #{tpu_custom_call.1} parent=1 // pred_fallthru
      _
    // Predicated region
    $region6: #{tpu_custom_call.1} parent=1 // pred_check
      _
    $region7: #{tpu_custom_call.1} parent=1 // pred_check_branch
      %31 = sbr.rel (0) target = $region9
    $region8: #{tpu_custom_call.1} parent=1 // pred_region
      %s33 = ssub.s32 128, 128
      %34 = vsyncadd [#allocation3], %s33
      %s35 = sshll.u32 [#allocation2], 4
      %s36 = int_to_ptr.vmem [resolvable:$true] %s35
      %41 = dma.hbm_to_vmem [thread:$0]  %s1, 128, %s36, [#allocation3], 64, 64, 4
    $region9: #{tpu_custom_call.1} parent=1 // pred_fallthru
      _
    // Predicated region
    $region10: #{tpu_custom_call.1} parent=1 // pred_check
      _
    $region11: #{tpu_custom_call.1} parent=1 // pred_check_branch
      %43 = sbr.rel (0) target = $region13
    $region12: #{tpu_custom_call.1} parent=1 // pred_region
      %s45 = ssub.s32 8192, 8192
      %46 = vsyncadd [#allocation6], %s45
      %s47 = sshll.u32 [#allocation5], 4
      %s48 = int_to_ptr.vmem [resolvable:$true] %s47
      %53 = dma.hbm_to_vmem [thread:$0]  %s2, 8192, %s48, [#allocation6], 128, 128, 8
    $region13: #{tpu_custom_call.1} parent=1 // pred_fallthru
      _
    // Predicated region
    $region14: #{tpu_custom_call.1} parent=1 // pred_check
      _
    $region15: #{tpu_custom_call.1} parent=1 // pred_check_branch
      %55 = sbr.rel (0) target = $region17
    $region16: #{tpu_custom_call.1} parent=1 // pred_region
      %s57 = ssub.s32 32, 32
      %58 = vsyncadd [#allocation6], %s57
      %s60 = sshll.u32 [#allocation7], 4
      %s61 = int_to_ptr.vmem [resolvable:$true] %s60
      %63 = dma.hbm_to_vmem [thread:$0]  %s3, 32, %s61, [#allocation6]
    $region17: #{tpu_custom_call.1} parent=1 // pred_fallthru
      _
    // Predicated region
    $region18: #{tpu_custom_call.1} parent=1 // pred_check
      _
    $region19: #{tpu_custom_call.1} parent=1 // pred_check_branch
      %65 = sbr.rel (0) target = $region21
    $region20: #{tpu_custom_call.1} parent=1 // pred_region
      %s67 = ssub.s32 128, 128
      %68 = vsyncadd [#allocation9], %s67
      %s69 = sshll.u32 [#allocation8], 4
      %s70 = int_to_ptr.vmem [resolvable:$true] %s69
      %75 = dma.hbm_to_vmem [thread:$0]  %s4, 128, %s70, [#allocation9], 64, 64, 4
    $region21: #{tpu_custom_call.1} parent=1 // pred_fallthru
      _
    // Predicated region
    $region22: #{tpu_custom_call.1} parent=1 // pred_check
      _
    $region23: #{tpu_custom_call.1} parent=1 // pred_check_branch
      %77 = sbr.rel (0) target = $region25
    $region24: #{tpu_custom_call.1} parent=1 // pred_region
      _
    $region25: #{tpu_custom_call.1} parent=1 // pred_fallthru
      _
    // Predicated region
    $region26: #{tpu_custom_call.1} parent=1 // pred_check
      _
    $region27: #{tpu_custom_call.1} parent=1 // pred_check_branch
      %79 = sbr.rel (0) target = $region29
    $region28: #{tpu_custom_call.1} parent=1 // pred_region
      %s81 = ssub.s32 512, 512
      %82 = vsyncadd [#allocation9], %s81
      %s83 = sshll.u32 [#allocation10], 4
      %s84 = int_to_ptr.vmem [resolvable:$true] %s83
      %89 = dma.hbm_to_vmem [thread:$0]  %s6, 512, %s84, [#allocation9], 64, 64, 4
    $region29: #{tpu_custom_call.1} parent=1 // pred_fallthru
      _
    // Predicated region
    $region30: #{tpu_custom_call.1} parent=1 // pred_check
      _
    $region31: #{tpu_custom_call.1} parent=1 // pred_check_branch
      %91 = sbr.rel (0) target = $region33
    $region32: #{tpu_custom_call.1} parent=1 // pred_region
      %s93 = ssub.s32 16, 16
      %94 = vsyncadd [#allocation12], %s93
      %s96 = sshll.u32 [#allocation11], 4
      %s97 = int_to_ptr.vmem [resolvable:$true] %s96
      %99 = dma.hbm_to_vmem [thread:$0]  %s7, 16, %s97, [#allocation12]
    $region33: #{tpu_custom_call.1} parent=1 // pred_fallthru
      _
    // Predicated region
    $region34: #{tpu_custom_call.1} parent=1 // pred_check
      _
    $region35: #{tpu_custom_call.1} parent=1 // pred_check_branch
      %101 = sbr.rel (0) target = $region37
    $region36: #{tpu_custom_call.1} parent=1 // pred_region
      _
    $region37: #{tpu_custom_call.1} parent=1 // pred_fallthru
      _
    // Predicated region
    $region38: #{tpu_custom_call.1} parent=1 // pred_check
      _
    $region39: #{tpu_custom_call.1} parent=1 // pred_check_branch
      %103 = sbr.rel (0) target = $region41
    $region40: #{tpu_custom_call.1} parent=1 // pred_region
      %s105 = ssub.s32 16, 16
      %106 = vsyncadd [#allocation12], %s105
      %s108 = sshll.u32 [#allocation13], 4
      %s109 = int_to_ptr.vmem [resolvable:$true] %s108
      %111 = dma.hbm_to_vmem [thread:$0]  %s9, 16, %s109, [#allocation12]
    $region41: #{tpu_custom_call.1} parent=1 // pred_fallthru
      _
    // Predicated region
    $region42: #{tpu_custom_call.1} parent=1 // pred_check
      _
    $region43: #{tpu_custom_call.1} parent=1 // pred_check_branch
      %113 = sbr.rel (0) target = $region45
    $region44: #{tpu_custom_call.1} parent=1 // pred_region
      _
    $region45: #{tpu_custom_call.1} parent=1 // pred_fallthru
      _
    // Predicated region
    $region46: #{tpu_custom_call.1} parent=1 // pred_check
      _
    $region47: #{tpu_custom_call.1} parent=1 // pred_check_branch
      %115 = sbr.rel (0) target = $region49
    $region48: #{tpu_custom_call.1} parent=1 // pred_region
      %s117 = ssub.s32 256, 256
      %118 = vsyncadd [#allocation15], %s117
      %s119 = sshll.u32 [#allocation14], 4
      %s120 = int_to_ptr.vmem [resolvable:$true] %s119
      %125 = dma.hbm_to_vmem [thread:$0]  %s11, 256, %s120, [#allocation15], 64, 64, 4
    $region49: #{tpu_custom_call.1} parent=1 // pred_fallthru
      _
    // Predicated region
    $region50: #{tpu_custom_call.1} parent=1 // pred_check
      _
    $region51: #{tpu_custom_call.1} parent=1 // pred_check_branch
      %127 = sbr.rel (0) target = $region53
    $region52: #{tpu_custom_call.1} parent=1 // pred_region
      %s129 = ssub.s32 16, 16
      %130 = vsyncadd [#allocation15], %s129
      %s132 = sshll.u32 [#allocation16], 4
      %s133 = int_to_ptr.vmem [resolvable:$true] %s132
      %135 = dma.hbm_to_vmem [thread:$0]  %s12, 16, %s133, [#allocation15]
    $region53: #{tpu_custom_call.1} parent=1 // pred_fallthru
      _
    // Predicated region
    $region54: #{tpu_custom_call.1} parent=1 // pred_check
      _
    $region55: #{tpu_custom_call.1} parent=1 // pred_check_branch
      %137 = sbr.rel (0) target = $region57
    $region56: #{tpu_custom_call.1} parent=1 // pred_region
      _
    $region57: #{tpu_custom_call.1} parent=1 // pred_fallthru
      _
    // Predicated region
    $region58: #{tpu_custom_call.1} parent=1 // pred_check
      _
    $region59: #{tpu_custom_call.1} parent=1 // pred_check_branch
      %139 = sbr.rel (0) target = $region61
    $region60: #{tpu_custom_call.1} parent=1 // pred_region
      _
    $region61: #{tpu_custom_call.1} parent=1 // pred_fallthru
      _
    // Predicated region
    $region62: #{tpu_custom_call.1} parent=1 // pred_check
      _
    $region63: #{tpu_custom_call.1} parent=1 // pred_check_branch
      %141 = sbr.rel (0) target = $region65
    $region64: #{tpu_custom_call.1} parent=1 // pred_region
      _
    $region65: #{tpu_custom_call.1} parent=1 // pred_fallthru
      _
    // Predicated region
    $region66: #{tpu_custom_call.1} parent=1 // pred_check
      _
    $region67: #{tpu_custom_call.1} parent=1 // pred_check_branch
      %143 = sbr.rel (0) target = $region69
    $region68: #{tpu_custom_call.1} parent=1 // pred_region
      _
    $region69: #{tpu_custom_call.1} parent=1 // pred_fallthru
      _
    // Predicated region
    $region70: #{tpu_custom_call.1} parent=1 // pred_check
      _
    $region71: #{tpu_custom_call.1} parent=1 // pred_check_branch
      %145 = sbr.rel (0) target = $region73
    $region72: #{tpu_custom_call.1} parent=1 // pred_region
      %146 = dma.done [#allocation3], 128
    $region73: #{tpu_custom_call.1} parent=1 // pred_fallthru
      _
    // Predicated region
    $region74: #{tpu_custom_call.1} parent=1 // pred_check
      _
    $region75: #{tpu_custom_call.1} parent=1 // pred_check_branch
      %148 = sbr.rel (0) target = $region77
    $region76: #{tpu_custom_call.1} parent=1 // pred_region
      %149 = dma.done [#allocation6], 8192
    $region77: #{tpu_custom_call.1} parent=1 // pred_fallthru
      _
    // Predicated region
    $region78: #{tpu_custom_call.1} parent=1 // pred_check
      _
    $region79: #{tpu_custom_call.1} parent=1 // pred_check_branch
      %151 = sbr.rel (0) target = $region81
    $region80: #{tpu_custom_call.1} parent=1 // pred_region
      %152 = dma.done [#allocation6], 32
    $region81: #{tpu_custom_call.1} parent=1 // pred_fallthru
      _
    // Predicated region
    $region82: #{tpu_custom_call.1} parent=1 // pred_check
      _
    $region83: #{tpu_custom_call.1} parent=1 // pred_check_branch
      %154 = sbr.rel (0) target = $region85
    $region84: #{tpu_custom_call.1} parent=1 // pred_region
      %155 = dma.done [#allocation9], 128
    $region85: #{tpu_custom_call.1} parent=1 // pred_fallthru
      _
    // Predicated region
    $region86: #{tpu_custom_call.1} parent=1 // pred_check
      _
    $region87: #{tpu_custom_call.1} parent=1 // pred_check_branch
      %157 = sbr.rel (0) target = $region89
    $region88: #{tpu_custom_call.1} parent=1 // pred_region
      %158 = dma.done [#allocation9], 512
    $region89: #{tpu_custom_call.1} parent=1 // pred_fallthru
      _
    // Predicated region
    $region90: #{tpu_custom_call.1} parent=1 // pred_check
      _
    $region91: #{tpu_custom_call.1} parent=1 // pred_check_branch
      %160 = sbr.rel (0) target = $region93
    $region92: #{tpu_custom_call.1} parent=1 // pred_region
      %161 = dma.done [#allocation12], 16
    $region93: #{tpu_custom_call.1} parent=1 // pred_fallthru
      _
    // Predicated region
    $region94: #{tpu_custom_call.1} parent=1 // pred_check
      _
    $region95: #{tpu_custom_call.1} parent=1 // pred_check_branch
      %163 = sbr.rel (0) target = $region97
    $region96: #{tpu_custom_call.1} parent=1 // pred_region
      %164 = dma.done [#allocation12], 16
    $region97: #{tpu_custom_call.1} parent=1 // pred_fallthru
      _
    // Predicated region
    $region98: #{tpu_custom_call.1} parent=1 // pred_check
      _
    $region99: #{tpu_custom_call.1} parent=1 // pred_check_branch
      %166 = sbr.rel (0) target = $region101
    $region100: #{tpu_custom_call.1} parent=1 // pred_region
      %167 = dma.done [#allocation15], 256
    $region101: #{tpu_custom_call.1} parent=1 // pred_fallthru
      _
    // Predicated region
    $region102: #{tpu_custom_call.1} parent=1 // pred_check
      _
    $region103: #{tpu_custom_call.1} parent=1 // pred_check_branch
      %169 = sbr.rel (0) target = $region105
    $region104: #{tpu_custom_call.1} parent=1 // pred_region
      %170 = dma.done [#allocation15], 16
    $region105: #{tpu_custom_call.1} parent=1 // pred_fallthru
      _
    %v172 = vld [vmem:[%s0] sm:$0xff]
    %v173 = vld [vmem:[%s0 + $0x8] sm:$0xff]
    %v174 = vld [vmem:[%s0 + $0x10] sm:$0xff]
    %v175 = vld [vmem:[%s0 + $0x18] sm:$0xff]
    %v176 = vld [vmem:[#allocation5] sm:$0xff]
    %v177 = vld [vmem:[#allocation5 + $0x8] sm:$0xff]
    %v178 = vld [vmem:[#allocation5 + $0x10] sm:$0xff]
    %v179 = vld [vmem:[#allocation5 + $0x18] sm:$0xff]
    %v180 = vld [vmem:[#allocation5 + $0x20] sm:$0xff]
    %v181 = vld [vmem:[#allocation5 + $0x28] sm:$0xff]
    %v182 = vld [vmem:[#allocation5 + $0x30] sm:$0xff]
    %v183 = vld [vmem:[#allocation5 + $0x38] sm:$0xff]
    %v184 = vld [vmem:[#allocation5 + $0x40] sm:$0xff]
    %v185 = vld [vmem:[#allocation5 + $0x48] sm:$0xff]
    %v186 = vld [vmem:[#allocation5 + $0x50] sm:$0xff]
    %v187 = vld [vmem:[#allocation5 + $0x58] sm:$0xff]
    %v188 = vld [vmem:[#allocation5 + $0x60] sm:$0xff]
    %v189 = vld [vmem:[#allocation5 + $0x68] sm:$0xff]
    %v190 = vld [vmem:[#allocation5 + $0x70] sm:$0xff]
    %v191 = vld [vmem:[#allocation5 + $0x78] sm:$0xff]
    %v192 = vld [vmem:[#allocation5 + $0x80] sm:$0xff]
    %v193 = vld [vmem:[#allocation5 + $0x88] sm:$0xff]
    %v194 = vld [vmem:[#allocation5 + $0x90] sm:$0xff]
    %v195 = vld [vmem:[#allocation5 + $0x98] sm:$0xff]
    %v196 = vld [vmem:[#allocation5 + $0xa0] sm:$0xff]
    %v197 = vld [vmem:[#allocation5 + $0xa8] sm:$0xff]
    %v198 = vld [vmem:[#allocation5 + $0xb0] sm:$0xff]
    %v199 = vld [vmem:[#allocation5 + $0xb8] sm:$0xff]
    %v200 = vld [vmem:[#allocation5 + $0xc0] sm:$0xff]
    %v201 = vld [vmem:[#allocation5 + $0xc8] sm:$0xff]
    %v202 = vld [vmem:[#allocation5 + $0xd0] sm:$0xff]
    %v203 = vld [vmem:[#allocation5 + $0xd8] sm:$0xff]
    %v204 = vld [vmem:[#allocation5 + $0xe0] sm:$0xff]
    %v205 = vld [vmem:[#allocation5 + $0xe8] sm:$0xff]
    %v206 = vld [vmem:[#allocation5 + $0xf0] sm:$0xff]
    %v207 = vld [vmem:[#allocation5 + $0xf8] sm:$0xff]
    %v208 = vld [vmem:[#allocation5 + $0x100] sm:$0xff]
    %v209 = vld [vmem:[#allocation5 + $0x108] sm:$0xff]
    %v210 = vld [vmem:[#allocation5 + $0x110] sm:$0xff]
    %v211 = vld [vmem:[#allocation5 + $0x118] sm:$0xff]
    %v212 = vld [vmem:[#allocation5 + $0x120] sm:$0xff]
    %v213 = vld [vmem:[#allocation5 + $0x128] sm:$0xff]
    %v214 = vld [vmem:[#allocation5 + $0x130] sm:$0xff]
    %v215 = vld [vmem:[#allocation5 + $0x138] sm:$0xff]
    %v216 = vld [vmem:[#allocation5 + $0x140] sm:$0xff]
    %v217 = vld [vmem:[#allocation5 + $0x148] sm:$0xff]
    %v218 = vld [vmem:[#allocation5 + $0x150] sm:$0xff]
    %v219 = vld [vmem:[#allocation5 + $0x158] sm:$0xff]
    %v220 = vld [vmem:[#allocation5 + $0x160] sm:$0xff]
    %v221 = vld [vmem:[#allocation5 + $0x168] sm:$0xff]
    %v222 = vld [vmem:[#allocation5 + $0x170] sm:$0xff]
    %v223 = vld [vmem:[#allocation5 + $0x178] sm:$0xff]
    %v224 = vld [vmem:[#allocation5 + $0x180] sm:$0xff]
    %v225 = vld [vmem:[#allocation5 + $0x188] sm:$0xff]
    %v226 = vld [vmem:[#allocation5 + $0x190] sm:$0xff]
    %v227 = vld [vmem:[#allocation5 + $0x198] sm:$0xff]
    %v228 = vld [vmem:[#allocation5 + $0x1a0] sm:$0xff]
    %v229 = vld [vmem:[#allocation5 + $0x1a8] sm:$0xff]
    %v230 = vld [vmem:[#allocation5 + $0x1b0] sm:$0xff]
    %v231 = vld [vmem:[#allocation5 + $0x1b8] sm:$0xff]
    %v232 = vld [vmem:[#allocation5 + $0x1c0] sm:$0xff]
    %v233 = vld [vmem:[#allocation5 + $0x1c8] sm:$0xff]
    %v234 = vld [vmem:[#allocation5 + $0x1d0] sm:$0xff]
    %v235 = vld [vmem:[#allocation5 + $0x1d8] sm:$0xff]
    %v236 = vld [vmem:[#allocation5 + $0x1e0] sm:$0xff]
    %v237 = vld [vmem:[#allocation5 + $0x1e8] sm:$0xff]
    %v238 = vld [vmem:[#allocation5 + $0x1f0] sm:$0xff]
    %v239 = vld [vmem:[#allocation5 + $0x1f8] sm:$0xff]
    %v240 = vld [vmem:[#allocation7] sm:$0x3]
    %v242 = vlaneseq
    %v243 = vshrl.u32 %v242, 7
    %v244 = vsub.s32 0, %v243
    %v245 = vrot.slane %v240, %v244
    %v246 = vlaneseq
    %v247 = vshrl.u32 %v246, 7
    %v248 = vsub.s32 1, %v247
    %v249 = vrot.slane %v240, %v248
    %v256 = vunpack.c.l.b16 %v172
    %v257 = vunpack.c.h.b16 %v172
    %v258 = vunpack.c.l.b16 %v173
    %v259 = vunpack.c.h.b16 %v173
    %v260 = vunpack.c.l.b16 %v174
    %v261 = vunpack.c.h.b16 %v174
    %v262 = vunpack.c.l.b16 %v175
    %v263 = vunpack.c.h.b16 %v175
    %v264 = vpack.c.b16 %v260, %v256
    %v265 = vpack.c.b16 %v261, %v257
    %v266 = vpack.c.b16 %v262, %v258
    %v267 = vpack.c.b16 %v263, %v259
    %v336 = vunpack.c.l.b16 %v176
    %v337 = vunpack.c.h.b16 %v176
    %v338 = vunpack.c.l.b16 %v177
    %v339 = vunpack.c.h.b16 %v177
    %v340 = vunpack.c.l.b16 %v178
    %v341 = vunpack.c.h.b16 %v178
    %v342 = vunpack.c.l.b16 %v179
    %v343 = vunpack.c.h.b16 %v179
    %v344 = vunpack.c.l.b16 %v180
    %v345 = vunpack.c.h.b16 %v180
    %v346 = vunpack.c.l.b16 %v181
    %v347 = vunpack.c.h.b16 %v181
    %v348 = vunpack.c.l.b16 %v182
    %v349 = vunpack.c.h.b16 %v182
    %v350 = vunpack.c.l.b16 %v183
    %v351 = vunpack.c.h.b16 %v183
    %v352 = vunpack.c.l.b16 %v184
    %v353 = vunpack.c.h.b16 %v184
    %v354 = vunpack.c.l.b16 %v185
    %v355 = vunpack.c.h.b16 %v185
    %v356 = vunpack.c.l.b16 %v186
    %v357 = vunpack.c.h.b16 %v186
    %v358 = vunpack.c.l.b16 %v187
    %v359 = vunpack.c.h.b16 %v187
    %v360 = vunpack.c.l.b16 %v188
    %v361 = vunpack.c.h.b16 %v188
    %v362 = vunpack.c.l.b16 %v189
    %v363 = vunpack.c.h.b16 %v189
    %v364 = vunpack.c.l.b16 %v190
    %v365 = vunpack.c.h.b16 %v190
    %v366 = vunpack.c.l.b16 %v191
    %v367 = vunpack.c.h.b16 %v191
    %v368 = vunpack.c.l.b16 %v192
    %v369 = vunpack.c.h.b16 %v192
    %v370 = vunpack.c.l.b16 %v193
    %v371 = vunpack.c.h.b16 %v193
    %v372 = vunpack.c.l.b16 %v194
    %v373 = vunpack.c.h.b16 %v194
    %v374 = vunpack.c.l.b16 %v195
    %v375 = vunpack.c.h.b16 %v195
    %v376 = vunpack.c.l.b16 %v196
    %v377 = vunpack.c.h.b16 %v196
    %v378 = vunpack.c.l.b16 %v197
    %v379 = vunpack.c.h.b16 %v197
    %v380 = vunpack.c.l.b16 %v198
    %v381 = vunpack.c.h.b16 %v198
    %v382 = vunpack.c.l.b16 %v199
    %v383 = vunpack.c.h.b16 %v199
    %v384 = vunpack.c.l.b16 %v200
    %v385 = vunpack.c.h.b16 %v200
    %v386 = vunpack.c.l.b16 %v201
    %v387 = vunpack.c.h.b16 %v201
    %v388 = vunpack.c.l.b16 %v202
    %v389 = vunpack.c.h.b16 %v202
    %v390 = vunpack.c.l.b16 %v203
    %v391 = vunpack.c.h.b16 %v203
    %v392 = vunpack.c.l.b16 %v204
    %v393 = vunpack.c.h.b16 %v204
    %v394 = vunpack.c.l.b16 %v205
    %v395 = vunpack.c.h.b16 %v205
    %v396 = vunpack.c.l.b16 %v206
    %v397 = vunpack.c.h.b16 %v206
    %v398 = vunpack.c.l.b16 %v207
    %v399 = vunpack.c.h.b16 %v207
    %v400 = vunpack.c.l.b16 %v208
    %v401 = vunpack.c.h.b16 %v208
    %v402 = vunpack.c.l.b16 %v209
    %v403 = vunpack.c.h.b16 %v209
    %v404 = vunpack.c.l.b16 %v210
    %v405 = vunpack.c.h.b16 %v210
    %v406 = vunpack.c.l.b16 %v211
    %v407 = vunpack.c.h.b16 %v211
    %v408 = vunpack.c.l.b16 %v212
    %v409 = vunpack.c.h.b16 %v212
    %v410 = vunpack.c.l.b16 %v213
    %v411 = vunpack.c.h.b16 %v213
    %v412 = vunpack.c.l.b16 %v214
    %v413 = vunpack.c.h.b16 %v214
    %v414 = vunpack.c.l.b16 %v215
    %v415 = vunpack.c.h.b16 %v215
    %v416 = vunpack.c.l.b16 %v216
    %v417 = vunpack.c.h.b16 %v216
    %v418 = vunpack.c.l.b16 %v217
    %v419 = vunpack.c.h.b16 %v217
    %v420 = vunpack.c.l.b16 %v218
    %v421 = vunpack.c.h.b16 %v218
    %v422 = vunpack.c.l.b16 %v219
    %v423 = vunpack.c.h.b16 %v219
    %v424 = vunpack.c.l.b16 %v220
    %v425 = vunpack.c.h.b16 %v220
    %v426 = vunpack.c.l.b16 %v221
    %v427 = vunpack.c.h.b16 %v221
    %v428 = vunpack.c.l.b16 %v222
    %v429 = vunpack.c.h.b16 %v222
    %v430 = vunpack.c.l.b16 %v223
    %v431 = vunpack.c.h.b16 %v223
    %v432 = vunpack.c.l.b16 %v224
    %v433 = vunpack.c.h.b16 %v224
    %v434 = vunpack.c.l.b16 %v225
    %v435 = vunpack.c.h.b16 %v225
    %v436 = vunpack.c.l.b16 %v226
    %v437 = vunpack.c.h.b16 %v226
    %v438 = vunpack.c.l.b16 %v227
    %v439 = vunpack.c.h.b16 %v227
    %v440 = vunpack.c.l.b16 %v228
    %v441 = vunpack.c.h.b16 %v228
    %v442 = vunpack.c.l.b16 %v229
    %v443 = vunpack.c.h.b16 %v229
    %v444 = vunpack.c.l.b16 %v230
    %v445 = vunpack.c.h.b16 %v230
    %v446 = vunpack.c.l.b16 %v231
    %v447 = vunpack.c.h.b16 %v231
    %v448 = vunpack.c.l.b16 %v232
    %v449 = vunpack.c.h.b16 %v232
    %v450 = vunpack.c.l.b16 %v233
    %v451 = vunpack.c.h.b16 %v233
    %v452 = vunpack.c.l.b16 %v234
    %v453 = vunpack.c.h.b16 %v234
    %v454 = vunpack.c.l.b16 %v235
    %v455 = vunpack.c.h.b16 %v235
    %v456 = vunpack.c.l.b16 %v236
    %v457 = vunpack.c.h.b16 %v236
    %v458 = vunpack.c.l.b16 %v237
    %v459 = vunpack.c.h.b16 %v237
    %v460 = vunpack.c.l.b16 %v238
    %v461 = vunpack.c.h.b16 %v238
    %v462 = vunpack.c.l.b16 %v239
    %v463 = vunpack.c.h.b16 %v239
    %v464 = vpack.c.b16 %v338, %v336
    %v465 = vpack.c.b16 %v339, %v337
    %v466 = vpack.c.b16 %v342, %v340
    %v467 = vpack.c.b16 %v343, %v341
    %v468 = vpack.c.b16 %v346, %v344
    %v469 = vpack.c.b16 %v347, %v345
    %v470 = vpack.c.b16 %v350, %v348
    %v471 = vpack.c.b16 %v351, %v349
    %v472 = vpack.c.b16 %v354, %v352
    %v473 = vpack.c.b16 %v355, %v353
    %v474 = vpack.c.b16 %v358, %v356
    %v475 = vpack.c.b16 %v359, %v357
    %v476 = vpack.c.b16 %v362, %v360
    %v477 = vpack.c.b16 %v363, %v361
    %v478 = vpack.c.b16 %v366, %v364
    %v479 = vpack.c.b16 %v367, %v365
    %v480 = vpack.c.b16 %v370, %v368
    %v481 = vpack.c.b16 %v371, %v369
    %v482 = vpack.c.b16 %v374, %v372
    %v483 = vpack.c.b16 %v375, %v373
    %v484 = vpack.c.b16 %v378, %v376
    %v485 = vpack.c.b16 %v379, %v377
    %v486 = vpack.c.b16 %v382, %v380
    %v487 = vpack.c.b16 %v383, %v381
    %v488 = vpack.c.b16 %v386, %v384
    %v489 = vpack.c.b16 %v387, %v385
    %v490 = vpack.c.b16 %v390, %v388
    %v491 = vpack.c.b16 %v391, %v389
    %v492 = vpack.c.b16 %v394, %v392
    %v493 = vpack.c.b16 %v395, %v393
    %v494 = vpack.c.b16 %v398, %v396
    %v495 = vpack.c.b16 %v399, %v397
    %v496 = vpack.c.b16 %v402, %v400
    %v497 = vpack.c.b16 %v403, %v401
    %v498 = vpack.c.b16 %v406, %v404
    %v499 = vpack.c.b16 %v407, %v405
    %v500 = vpack.c.b16 %v410, %v408
    %v501 = vpack.c.b16 %v411, %v409
    %v502 = vpack.c.b16 %v414, %v412
    %v503 = vpack.c.b16 %v415, %v413
    %v504 = vpack.c.b16 %v418, %v416
    %v505 = vpack.c.b16 %v419, %v417
    %v506 = vpack.c.b16 %v422, %v420
    %v507 = vpack.c.b16 %v423, %v421
    %v508 = vpack.c.b16 %v426, %v424
    %v509 = vpack.c.b16 %v427, %v425
    %v510 = vpack.c.b16 %v430, %v428
    %v511 = vpack.c.b16 %v431, %v429
    %v512 = vpack.c.b16 %v434, %v432
    %v513 = vpack.c.b16 %v435, %v433
    %v514 = vpack.c.b16 %v438, %v436
    %v515 = vpack.c.b16 %v439, %v437
    %v516 = vpack.c.b16 %v442, %v440
    %v517 = vpack.c.b16 %v443, %v441
    %v518 = vpack.c.b16 %v446, %v444
    %v519 = vpack.c.b16 %v447, %v445
    %v520 = vpack.c.b16 %v450, %v448
    %v521 = vpack.c.b16 %v451, %v449
    %v522 = vpack.c.b16 %v454, %v452
    %v523 = vpack.c.b16 %v455, %v453
    %v524 = vpack.c.b16 %v458, %v456
    %v525 = vpack.c.b16 %v459, %v457
    %v526 = vpack.c.b16 %v462, %v460
    %v527 = vpack.c.b16 %v463, %v461
    %592 = vmatprep.subr.bf16.mxu0 %v465
    %593 = vmatpush1.bf16.msra.mxu0 %v464
    %594 = vmatprep.subr.bf16.mxu0 %v467
    %595 = vmatpush1.bf16.msra.mxu0 %v466
    %596 = vmatprep.subr.bf16.mxu0 %v469
    %597 = vmatpush1.bf16.msra.mxu0 %v468
    %598 = vmatprep.subr.bf16.mxu0 %v471
    %599 = vmatpush1.bf16.msra.mxu0 %v470
    %600 = vmatprep.subr.bf16.mxu0 %v473
    %601 = vmatpush1.bf16.msra.mxu0 %v472
    %602 = vmatprep.subr.bf16.mxu0 %v475
    %603 = vmatpush1.bf16.msra.mxu0 %v474
    %604 = vmatprep.subr.bf16.mxu0 %v477
    %605 = vmatpush1.bf16.msra.mxu0 %v476
    %606 = vmatprep.subr.bf16.mxu0 %v479
    %607 = vmatpush1.bf16.msra.mxu0 %v478
    %608 = vmatprep.subr.bf16.mxu0 %v481
    %609 = vmatpush1.bf16.msra.mxu0 %v480
    %610 = vmatprep.subr.bf16.mxu0 %v483
    %611 = vmatpush1.bf16.msra.mxu0 %v482
    %612 = vmatprep.subr.bf16.mxu0 %v485
    %613 = vmatpush1.bf16.msra.mxu0 %v484
    %614 = vmatprep.subr.bf16.mxu0 %v487
    %615 = vmatpush1.bf16.msra.mxu0 %v486
    %616 = vmatprep.subr.bf16.mxu0 %v489
    %617 = vmatpush1.bf16.msra.mxu0 %v488
    %618 = vmatprep.subr.bf16.mxu0 %v491
    %619 = vmatpush1.bf16.msra.mxu0 %v490
    %620 = vmatprep.subr.bf16.mxu0 %v493
    %621 = vmatpush1.bf16.msra.mxu0 %v492
    %622 = vmatprep.subr.bf16.mxu0 %v495
    %623 = vmatpush1.bf16.msra.mxu0 %v494
    %624 = vmatprep.mubr.bf16.mxu0 %v265
    %625 = vmatmul.mubr.bf16.gmra.mrb[0].mxu0 %v264
    %v626 = vpop.f32.mrb[0].mxu0
    %v627 = vadd.f32 %v245, %v626
    %v628 = vpop.f32.mrb[0].mxu0
    %v629 = vadd.f32 %v249, %v628
    %v630 = vpop.f32.mrb[0].mxu0
    %v631 = vadd.f32 %v245, %v630
    %v632 = vpop.f32.mrb[0].mxu0
    %v633 = vadd.f32 %v249, %v632
    %634 = vdwg.mxu0
    %635 = vmatprep.subr.bf16.mxu0 %v497
    %636 = vmatpush1.bf16.msra.mxu0 %v496
    %637 = vmatprep.subr.bf16.mxu0 %v499
    %638 = vmatpush1.bf16.msra.mxu0 %v498
    %639 = vmatprep.subr.bf16.mxu0 %v501
    %640 = vmatpush1.bf16.msra.mxu0 %v500
    %641 = vmatprep.subr.bf16.mxu0 %v503
    %642 = vmatpush1.bf16.msra.mxu0 %v502
    %643 = vmatprep.subr.bf16.mxu0 %v505
    %644 = vmatpush1.bf16.msra.mxu0 %v504
    %645 = vmatprep.subr.bf16.mxu0 %v507
    %646 = vmatpush1.bf16.msra.mxu0 %v506
    %647 = vmatprep.subr.bf16.mxu0 %v509
    %648 = vmatpush1.bf16.msra.mxu0 %v508
    %649 = vmatprep.subr.bf16.mxu0 %v511
    %650 = vmatpush1.bf16.msra.mxu0 %v510
    %651 = vmatprep.subr.bf16.mxu0 %v513
    %652 = vmatpush1.bf16.msra.mxu0 %v512
    %653 = vmatprep.subr.bf16.mxu0 %v515
    %654 = vmatpush1.bf16.msra.mxu0 %v514
    %655 = vmatprep.subr.bf16.mxu0 %v517
    %656 = vmatpush1.bf16.msra.mxu0 %v516
    %657 = vmatprep.subr.bf16.mxu0 %v519
    %658 = vmatpush1.bf16.msra.mxu0 %v518
    %659 = vmatprep.subr.bf16.mxu0 %v521
    %660 = vmatpush1.bf16.msra.mxu0 %v520
    %661 = vmatprep.subr.bf16.mxu0 %v523
    %662 = vmatpush1.bf16.msra.mxu0 %v522
    %663 = vmatprep.subr.bf16.mxu0 %v525
    %664 = vmatpush1.bf16.msra.mxu0 %v524
    %665 = vmatprep.subr.bf16.mxu0 %v527
    %666 = vmatpush1.bf16.msra.mxu0 %v526
    %667 = vmatprep.mubr.bf16.mxu0 %v267
    %668 = vmatmul.mubr.bf16.gmra.mrb[0].mxu0 %v266
    %v669 = vpop.f32.mrb[0].mxu0
    %v670 = vadd.f32 %v627, %v669
    %v671 = vpop.f32.mrb[0].mxu0
    %v672 = vadd.f32 %v629, %v671
    %v673 = vpop.f32.mrb[0].mxu0
    %v674 = vadd.f32 %v631, %v673
    %v675 = vpop.f32.mrb[0].mxu0
    %v676 = vadd.f32 %v633, %v675
    %677 = vdwg.mxu0
    %v678 = vmax.f32 %v670, 0.0
    %v679 = vmax.f32 %v672, 0.0
    %v680 = vmax.f32 %v674, 0.0
    %v681 = vmax.f32 %v676, 0.0
    %v682 = vld [vmem:[#allocation2] sm:$0xf]
    %v683 = vld [vmem:[#allocation2 + $0x4] sm:$0xf]
    %v684 = vld [vmem:[#allocation8] sm:$0xf]
    %v685 = vld [vmem:[#allocation8 + $0x4] sm:$0x1]
    %v686 = vld [vmem:[%s5] sm:$0x1]
    %v688 = vlaneseq
    %v689 = vshrl.u32 %v688, 7
    %v690 = vsub.s32 0, %v689
    %v691 = vrot.slane %v686, %v690
    %v695 = vunpack.c.l.b16 %v682
    %v696 = vunpack.c.l.b16 %v683
    %v697 = vpack.c.b16 %v696, %v695
    %v700 = vunpack.c.l.b16 %v684
    %v701 = vunpack.c.l.b16 %v685
    %v702 = vpack.c.b16 %v701, %v700
    %vm703 = vcmask 80896
    %v705 = vsel %vm703, %v697, 0
    %vm707 = vcmask 1044480
    %v709 = vsel %vm707, %v702, 0
    %711 = vmatprep.subr.bf16.mxu0 0
    %712 = vmatpush1.bf16.msra.mxu0 %v709
    %713 = vmatprep.subr.bf16.mxu0 0
    %714 = vmatpush1.bf16.msra.mxu0 0
    %715 = vmatprep.subr.bf16.mxu0 0
    %716 = vmatpush1.bf16.msra.mxu0 0
    %717 = vmatprep.subr.bf16.mxu0 0
    %718 = vmatpush1.bf16.msra.mxu0 0
    %719 = vmatprep.subr.bf16.mxu0 0
    %720 = vmatpush1.bf16.msra.mxu0 0
    %721 = vmatprep.subr.bf16.mxu0 0
    %722 = vmatpush1.bf16.msra.mxu0 0
    %723 = vmatprep.subr.bf16.mxu0 0
    %724 = vmatpush1.bf16.msra.mxu0 0
    %725 = vmatprep.subr.bf16.mxu0 0
    %726 = vmatpush1.bf16.msra.mxu0 0
    %727 = vmatprep.subr.bf16.mxu0 0
    %728 = vmatpush1.bf16.msra.mxu0 0
    %729 = vmatprep.subr.bf16.mxu0 0
    %730 = vmatpush1.bf16.msra.mxu0 0
    %731 = vmatprep.subr.bf16.mxu0 0
    %732 = vmatpush1.bf16.msra.mxu0 0
    %733 = vmatprep.subr.bf16.mxu0 0
    %734 = vmatpush1.bf16.msra.mxu0 0
    %735 = vmatprep.subr.bf16.mxu0 0
    %736 = vmatpush1.bf16.msra.mxu0 0
    %737 = vmatprep.subr.bf16.mxu0 0
    %738 = vmatpush1.bf16.msra.mxu0 0
    %739 = vmatprep.subr.bf16.mxu0 0
    %740 = vmatpush1.bf16.msra.mxu0 0
    %741 = vmatprep.subr.bf16.mxu0 0
    %742 = vmatpush1.bf16.msra.mxu0 0
    %743 = vmatprep.mubr.bf16.mxu0 0
    %744 = vmatmul.mubr.bf16.gmra.mrb[0].mxu0 %v705
    %v745 = vpop.f32.mrb[0].mxu0
    %v746 = vadd.f32 %v691, %v745
    %v747 = vpop.f32.mrb[0].mxu0
    %v748 = vpop.f32.mrb[0].mxu0
    %v749 = vadd.f32 %v691, %v748
    %v750 = vpop.f32.mrb[0].mxu0
    %751 = vdwg.mxu0
    %v752 = vmax.f32 %v746, 0.0
    %v753 = vmax.f32 %v749, 0.0
    %v754 = vpack.c.bf16 %v753, %v752
    %v755 = vld [vmem:[#allocation10] sm:$0xf]
    %v756 = vld [vmem:[#allocation10 + $0x4] sm:$0xf]
    %v757 = vld [vmem:[#allocation10 + $0x8] sm:$0xf]
    %v758 = vld [vmem:[#allocation10 + $0xc] sm:$0xf]
    %v759 = vld [vmem:[#allocation10 + $0x10] sm:$0xf]
    %v760 = vld [vmem:[#allocation10 + $0x14] sm:$0xf]
    %v761 = vld [vmem:[#allocation10 + $0x18] sm:$0xf]
    %v762 = vld [vmem:[#allocation10 + $0x1c] sm:$0xf]
    %v763 = vld [vmem:[#allocation11] sm:$0x1]
    %v765 = vlaneseq
    %v766 = vshrl.u32 %v765, 7
    %v767 = vsub.s32 0, %v766
    %v768 = vrot.slane %v763, %v767
    %v778 = vunpack.c.l.b16 %v755
    %v779 = vunpack.c.l.b16 %v756
    %v780 = vunpack.c.l.b16 %v757
    %v781 = vunpack.c.l.b16 %v758
    %v782 = vunpack.c.l.b16 %v759
    %v783 = vunpack.c.l.b16 %v760
    %v784 = vunpack.c.l.b16 %v761
    %v785 = vunpack.c.l.b16 %v762
    %v786 = vpack.c.b16 %v779, %v778
    %v787 = vpack.c.b16 %v781, %v780
    %v788 = vpack.c.b16 %v783, %v782
    %v789 = vpack.c.b16 %v785, %v784
    %vm794 = vcmask 523264
    %v796 = vsel %vm794, %v754, 0
    %798 = vmatprep.subr.bf16.mxu0 0
    %799 = vmatpush1.bf16.msra.mxu0 %v786
    %800 = vmatprep.subr.bf16.mxu0 0
    %801 = vmatpush1.bf16.msra.mxu0 %v787
    %802 = vmatprep.subr.bf16.mxu0 0
    %803 = vmatpush1.bf16.msra.mxu0 %v788
    %804 = vmatprep.subr.bf16.mxu0 0
    %805 = vmatpush1.bf16.msra.mxu0 %v789
    %806 = vmatprep.subr.bf16.mxu0 0
    %807 = vmatpush1.bf16.msra.mxu0 0
    %808 = vmatprep.subr.bf16.mxu0 0
    %809 = vmatpush1.bf16.msra.mxu0 0
    %810 = vmatprep.subr.bf16.mxu0 0
    %811 = vmatpush1.bf16.msra.mxu0 0
    %812 = vmatprep.subr.bf16.mxu0 0
    %813 = vmatpush1.bf16.msra.mxu0 0
    %814 = vmatprep.subr.bf16.mxu0 0
    %815 = vmatpush1.bf16.msra.mxu0 0
    %816 = vmatprep.subr.bf16.mxu0 0
    %817 = vmatpush1.bf16.msra.mxu0 0
    %818 = vmatprep.subr.bf16.mxu0 0
    %819 = vmatpush1.bf16.msra.mxu0 0
    %820 = vmatprep.subr.bf16.mxu0 0
    %821 = vmatpush1.bf16.msra.mxu0 0
    %822 = vmatprep.subr.bf16.mxu0 0
    %823 = vmatpush1.bf16.msra.mxu0 0
    %824 = vmatprep.subr.bf16.mxu0 0
    %825 = vmatpush1.bf16.msra.mxu0 0
    %826 = vmatprep.subr.bf16.mxu0 0
    %827 = vmatpush1.bf16.msra.mxu0 0
    %828 = vmatprep.subr.bf16.mxu0 0
    %829 = vmatpush1.bf16.msra.mxu0 0
    %830 = vmatprep.mubr.bf16.mxu0 0
    %831 = vmatmul.mubr.bf16.gmra.mrb[0].mxu0 %v796
    %v832 = vpop.f32.mrb[0].mxu0
    %v833 = vadd.f32 %v768, %v832
    %v834 = vpop.f32.mrb[0].mxu0
    %v835 = vpop.f32.mrb[0].mxu0
    %v836 = vadd.f32 %v768, %v835
    %v837 = vpop.f32.mrb[0].mxu0
    %838 = vdwg.mxu0
    %v839 = vmax.f32 %v833, 0.0
    %v840 = vmax.f32 %v836, 0.0
    %v841 = vpack.c.bf16 %v840, %v839
    %v842 = vld [vmem:[%s8] sm:$0xf]
    %v843 = vld [vmem:[%s8 + $0x4] sm:$0xf]
    %v844 = vld [vmem:[%s8 + $0x8] sm:$0xf]
    %v845 = vld [vmem:[%s8 + $0xc] sm:$0xf]
    %v846 = vld [vmem:[%s8 + $0x10] sm:$0xf]
    %v847 = vld [vmem:[%s8 + $0x14] sm:$0xf]
    %v848 = vld [vmem:[%s8 + $0x18] sm:$0xf]
    %v849 = vld [vmem:[%s8 + $0x1c] sm:$0xf]
    %v850 = vld [vmem:[#allocation13] sm:$0x1]
    %v852 = vlaneseq
    %v853 = vshrl.u32 %v852, 7
    %v854 = vsub.s32 0, %v853
    %v855 = vrot.slane %v850, %v854
    %v865 = vunpack.c.l.b16 %v842
    %v866 = vunpack.c.l.b16 %v843
    %v867 = vunpack.c.l.b16 %v844
    %v868 = vunpack.c.l.b16 %v845
    %v869 = vunpack.c.l.b16 %v846
    %v870 = vunpack.c.l.b16 %v847
    %v871 = vunpack.c.l.b16 %v848
    %v872 = vunpack.c.l.b16 %v849
    %v873 = vpack.c.b16 %v866, %v865
    %v874 = vpack.c.b16 %v868, %v867
    %v875 = vpack.c.b16 %v870, %v869
    %v876 = vpack.c.b16 %v872, %v871
    %v882 = vsel %vm794, %v841, 0
    %884 = vmatprep.subr.bf16.mxu0 0
    %885 = vmatpush1.bf16.msra.mxu0 %v873
    %886 = vmatprep.subr.bf16.mxu0 0
    %887 = vmatpush1.bf16.msra.mxu0 %v874
    %888 = vmatprep.subr.bf16.mxu0 0
    %889 = vmatpush1.bf16.msra.mxu0 %v875
    %890 = vmatprep.subr.bf16.mxu0 0
    %891 = vmatpush1.bf16.msra.mxu0 %v876
    %892 = vmatprep.subr.bf16.mxu0 0
    %893 = vmatpush1.bf16.msra.mxu0 0
    %894 = vmatprep.subr.bf16.mxu0 0
    %895 = vmatpush1.bf16.msra.mxu0 0
    %896 = vmatprep.subr.bf16.mxu0 0
    %897 = vmatpush1.bf16.msra.mxu0 0
    %898 = vmatprep.subr.bf16.mxu0 0
    %899 = vmatpush1.bf16.msra.mxu0 0
    %900 = vmatprep.subr.bf16.mxu0 0
    %901 = vmatpush1.bf16.msra.mxu0 0
    %902 = vmatprep.subr.bf16.mxu0 0
    %903 = vmatpush1.bf16.msra.mxu0 0
    %904 = vmatprep.subr.bf16.mxu0 0
    %905 = vmatpush1.bf16.msra.mxu0 0
    %906 = vmatprep.subr.bf16.mxu0 0
    %907 = vmatpush1.bf16.msra.mxu0 0
    %908 = vmatprep.subr.bf16.mxu0 0
    %909 = vmatpush1.bf16.msra.mxu0 0
    %910 = vmatprep.subr.bf16.mxu0 0
    %911 = vmatpush1.bf16.msra.mxu0 0
    %912 = vmatprep.subr.bf16.mxu0 0
    %913 = vmatpush1.bf16.msra.mxu0 0
    %914 = vmatprep.subr.bf16.mxu0 0
    %915 = vmatpush1.bf16.msra.mxu0 0
    %916 = vmatprep.mubr.bf16.mxu0 0
    %917 = vmatmul.mubr.bf16.gmra.mrb[0].mxu0 %v882
    %v918 = vpop.f32.mrb[0].mxu0
    %v919 = vadd.f32 %v855, %v918
    %v920 = vpop.f32.mrb[0].mxu0
    %v921 = vpop.f32.mrb[0].mxu0
    %v922 = vadd.f32 %v855, %v921
    %v923 = vpop.f32.mrb[0].mxu0
    %924 = vdwg.mxu0
    %v925 = vpack.c.bf16 %v680, %v678
    %v926 = vpack.c.bf16 %v681, %v679
    %v927 = vld [vmem:[%s10] sm:$0xf]
    %v928 = vld [vmem:[%s10 + $0x4] sm:$0xf]
    %v929 = vld [vmem:[%s10 + $0x8] sm:$0xf]
    %v930 = vld [vmem:[%s10 + $0xc] sm:$0xf]
    %v931 = vld [vmem:[%s10 + $0x10] sm:$0xf]
    %v932 = vld [vmem:[%s10 + $0x14] sm:$0xf]
    %v933 = vld [vmem:[%s10 + $0x18] sm:$0xf]
    %v934 = vld [vmem:[%s10 + $0x1c] sm:$0xf]
    %v935 = vld [vmem:[%s10 + $0x20] sm:$0xf]
    %v936 = vld [vmem:[%s10 + $0x24] sm:$0xf]
    %v937 = vld [vmem:[%s10 + $0x28] sm:$0xf]
    %v938 = vld [vmem:[%s10 + $0x2c] sm:$0xf]
    %v939 = vld [vmem:[%s10 + $0x30] sm:$0xf]
    %v940 = vld [vmem:[%s10 + $0x34] sm:$0xf]
    %v941 = vld [vmem:[%s10 + $0x38] sm:$0xf]
    %v942 = vld [vmem:[%s10 + $0x3c] sm:$0xf]
    %v943 = vld [vmem:[%s10 + $0x40] sm:$0xf]
    %v944 = vld [vmem:[%s10 + $0x44] sm:$0xf]
    %v945 = vld [vmem:[%s10 + $0x48] sm:$0xf]
    %v946 = vld [vmem:[%s10 + $0x4c] sm:$0xf]
    %v947 = vld [vmem:[%s10 + $0x50] sm:$0xf]
    %v948 = vld [vmem:[%s10 + $0x54] sm:$0xf]
    %v949 = vld [vmem:[%s10 + $0x58] sm:$0xf]
    %v950 = vld [vmem:[%s10 + $0x5c] sm:$0xf]
    %v951 = vld [vmem:[%s10 + $0x60] sm:$0xf]
    %v952 = vld [vmem:[%s10 + $0x64] sm:$0xf]
    %v953 = vld [vmem:[%s10 + $0x68] sm:$0xf]
    %v954 = vld [vmem:[%s10 + $0x6c] sm:$0xf]
    %v955 = vld [vmem:[%s10 + $0x70] sm:$0xf]
    %v956 = vld [vmem:[%s10 + $0x74] sm:$0xf]
    %v957 = vld [vmem:[%s10 + $0x78] sm:$0xf]
    %v958 = vld [vmem:[%s10 + $0x7c] sm:$0xf]
    %v959 = vpack.c.bf16 %v922, %v919
    %v960 = vld [vmem:[#allocation14] sm:$0xf]
    %v961 = vld [vmem:[#allocation14 + $0x4] sm:$0xf]
    %v962 = vld [vmem:[#allocation14 + $0x8] sm:$0xf]
    %v963 = vld [vmem:[#allocation14 + $0xc] sm:$0xf]
    %v968 = vunpack.c.l.b16 %v960
    %v969 = vunpack.c.l.b16 %v961
    %v970 = vunpack.c.l.b16 %v962
    %v971 = vunpack.c.l.b16 %v963
    %v972 = vpack.c.b16 %v969, %v968
    %v973 = vpack.c.b16 %v971, %v970
    %vm976 = vcmask 261120
    %v978 = vsel %vm976, %v959, 0
    %980 = vmatprep.subr.bf16.mxu0 0
    %981 = vmatpush1.bf16.msra.mxu0 %v972
    %982 = vmatprep.subr.bf16.mxu0 0
    %983 = vmatpush1.bf16.msra.mxu0 %v973
    %984 = vmatprep.subr.bf16.mxu0 0
    %985 = vmatpush1.bf16.msra.mxu0 0
    %986 = vmatprep.subr.bf16.mxu0 0
    %987 = vmatpush1.bf16.msra.mxu0 0
    %988 = vmatprep.subr.bf16.mxu0 0
    %989 = vmatpush1.bf16.msra.mxu0 0
    %990 = vmatprep.subr.bf16.mxu0 0
    %991 = vmatpush1.bf16.msra.mxu0 0
    %992 = vmatprep.subr.bf16.mxu0 0
    %993 = vmatpush1.bf16.msra.mxu0 0
    %994 = vmatprep.subr.bf16.mxu0 0
    %995 = vmatpush1.bf16.msra.mxu0 0
    %996 = vmatprep.subr.bf16.mxu0 0
    %997 = vmatpush1.bf16.msra.mxu0 0
    %998 = vmatprep.subr.bf16.mxu0 0
    %999 = vmatpush1.bf16.msra.mxu0 0
    %1000 = vmatprep.subr.bf16.mxu0 0
    %1001 = vmatpush1.bf16.msra.mxu0 0
    %1002 = vmatprep.subr.bf16.mxu0 0
    %1003 = vmatpush1.bf16.msra.mxu0 0
    %1004 = vmatprep.subr.bf16.mxu0 0
    %1005 = vmatpush1.bf16.msra.mxu0 0
    %1006 = vmatprep.subr.bf16.mxu0 0
    %1007 = vmatpush1.bf16.msra.mxu0 0
    %1008 = vmatprep.subr.bf16.mxu0 0
    %1009 = vmatpush1.bf16.msra.mxu0 0
    %1010 = vmatprep.subr.bf16.mxu0 0
    %1011 = vmatpush1.bf16.msra.mxu0 0
    %1012 = vmatprep.mubr.bf16.mxu0 0
    %1013 = vmatmul.mubr.bf16.gmra.mrb[0].mxu0 %v978
    %v1014 = vpop.f32.mrb[0].mxu0
    %v1015 = vadd.f32 0.0, %v1014
    %v1016 = vpop.f32.mrb[0].mxu0
    %v1017 = vpop.f32.mrb[0].mxu0
    %v1018 = vadd.f32 0.0, %v1017
    %v1019 = vpop.f32.mrb[0].mxu0
    %1020 = vdwg.mxu0
    %v1053 = vunpack.c.l.b16 %v927
    %v1054 = vunpack.c.l.b16 %v928
    %v1055 = vunpack.c.l.b16 %v929
    %v1056 = vunpack.c.l.b16 %v930
    %v1057 = vunpack.c.l.b16 %v931
    %v1058 = vunpack.c.l.b16 %v932
    %v1059 = vunpack.c.l.b16 %v933
    %v1060 = vunpack.c.l.b16 %v934
    %v1061 = vunpack.c.l.b16 %v935
    %v1062 = vunpack.c.l.b16 %v936
    %v1063 = vunpack.c.l.b16 %v937
    %v1064 = vunpack.c.l.b16 %v938
    %v1065 = vunpack.c.l.b16 %v939
    %v1066 = vunpack.c.l.b16 %v940
    %v1067 = vunpack.c.l.b16 %v941
    %v1068 = vunpack.c.l.b16 %v942
    %v1069 = vunpack.c.l.b16 %v943
    %v1070 = vunpack.c.l.b16 %v944
    %v1071 = vunpack.c.l.b16 %v945
    %v1072 = vunpack.c.l.b16 %v946
    %v1073 = vunpack.c.l.b16 %v947
    %v1074 = vunpack.c.l.b16 %v948
    %v1075 = vunpack.c.l.b16 %v949
    %v1076 = vunpack.c.l.b16 %v950
    %v1077 = vunpack.c.l.b16 %v951
    %v1078 = vunpack.c.l.b16 %v952
    %v1079 = vunpack.c.l.b16 %v953
    %v1080 = vunpack.c.l.b16 %v954
    %v1081 = vunpack.c.l.b16 %v955
    %v1082 = vunpack.c.l.b16 %v956
    %v1083 = vunpack.c.l.b16 %v957
    %v1084 = vunpack.c.l.b16 %v958
    %v1085 = vpack.c.b16 %v1054, %v1053
    %v1086 = vpack.c.b16 %v1056, %v1055
    %v1087 = vpack.c.b16 %v1058, %v1057
    %v1088 = vpack.c.b16 %v1060, %v1059
    %v1089 = vpack.c.b16 %v1062, %v1061
    %v1090 = vpack.c.b16 %v1064, %v1063
    %v1091 = vpack.c.b16 %v1066, %v1065
    %v1092 = vpack.c.b16 %v1068, %v1067
    %v1093 = vpack.c.b16 %v1070, %v1069
    %v1094 = vpack.c.b16 %v1072, %v1071
    %v1095 = vpack.c.b16 %v1074, %v1073
    %v1096 = vpack.c.b16 %v1076, %v1075
    %v1097 = vpack.c.b16 %v1078, %v1077
    %v1098 = vpack.c.b16 %v1080, %v1079
    %v1099 = vpack.c.b16 %v1082, %v1081
    %v1100 = vpack.c.b16 %v1084, %v1083
    %1117 = vmatprep.subr.bf16.mxu0 0
    %1118 = vmatpush1.bf16.msra.mxu0 %v1085
    %1119 = vmatprep.subr.bf16.mxu0 0
    %1120 = vmatpush1.bf16.msra.mxu0 %v1086
    %1121 = vmatprep.subr.bf16.mxu0 0
    %1122 = vmatpush1.bf16.msra.mxu0 %v1087
    %1123 = vmatprep.subr.bf16.mxu0 0
    %1124 = vmatpush1.bf16.msra.mxu0 %v1088
    %1125 = vmatprep.subr.bf16.mxu0 0
    %1126 = vmatpush1.bf16.msra.mxu0 %v1089
    %1127 = vmatprep.subr.bf16.mxu0 0
    %1128 = vmatpush1.bf16.msra.mxu0 %v1090
    %1129 = vmatprep.subr.bf16.mxu0 0
    %1130 = vmatpush1.bf16.msra.mxu0 %v1091
    %1131 = vmatprep.subr.bf16.mxu0 0
    %1132 = vmatpush1.bf16.msra.mxu0 %v1092
    %1133 = vmatprep.subr.bf16.mxu0 0
    %1134 = vmatpush1.bf16.msra.mxu0 %v1093
    %1135 = vmatprep.subr.bf16.mxu0 0
    %1136 = vmatpush1.bf16.msra.mxu0 %v1094
    %1137 = vmatprep.subr.bf16.mxu0 0
    %1138 = vmatpush1.bf16.msra.mxu0 %v1095
    %1139 = vmatprep.subr.bf16.mxu0 0
    %1140 = vmatpush1.bf16.msra.mxu0 %v1096
    %1141 = vmatprep.subr.bf16.mxu0 0
    %1142 = vmatpush1.bf16.msra.mxu0 %v1097
    %1143 = vmatprep.subr.bf16.mxu0 0
    %1144 = vmatpush1.bf16.msra.mxu0 %v1098
    %1145 = vmatprep.subr.bf16.mxu0 0
    %1146 = vmatpush1.bf16.msra.mxu0 %v1099
    %1147 = vmatprep.subr.bf16.mxu0 0
    %1148 = vmatpush1.bf16.msra.mxu0 %v1100
    %1149 = vmatprep.mubr.bf16.mxu0 %v926
    %1150 = vmatmul.mubr.bf16.gmra.mrb[0].mxu0 %v925
    %v1151 = vpop.f32.mrb[0].mxu0
    %v1152 = vadd.f32 %v1015, %v1151
    %v1153 = vpop.f32.mrb[0].mxu0
    %v1154 = vpop.f32.mrb[0].mxu0
    %v1155 = vadd.f32 %v1018, %v1154
    %v1156 = vpop.f32.mrb[0].mxu0
    %1157 = vdwg.mxu0
    %v1158 = vld [vmem:[#allocation16] sm:$0x1]
    %v1160 = vlaneseq
    %v1161 = vshrl.u32 %v1160, 7
    %v1162 = vsub.s32 0, %v1161
    %v1163 = vrot.slane %v1158, %v1162
    %v1165 = vadd.f32 %v1152, %v1163
    %v1166 = vadd.f32 %v1155, %v1163
    %v1167 = vmax.f32 %v1165, 0.0
    %v1168 = vmax.f32 %v1166, 0.0
    %v1169 = vpack.c.bf16 %v1168, %v1167
    %v1170 = vld [vmem:[%s13] sm:$0xf]
    %v1171 = vld [vmem:[%s13 + $0x4] sm:$0xf]
    %v1172 = vld [vmem:[%s13 + $0x8] sm:$0xf]
    %v1173 = vld [vmem:[%s13 + $0xc] sm:$0xf]
    %v1174 = vld [vmem:[%s13 + $0x10] sm:$0xf]
    %v1175 = vld [vmem:[%s13 + $0x14] sm:$0xf]
    %v1176 = vld [vmem:[%s13 + $0x18] sm:$0xf]
    %v1177 = vld [vmem:[%s13 + $0x1c] sm:$0xf]
    %v1178 = vld [vmem:[%s13 + $0x20] sm:$0xf]
    %v1179 = vld [vmem:[%s13 + $0x24] sm:$0xf]
    %v1180 = vld [vmem:[%s13 + $0x28] sm:$0xf]
    %v1181 = vld [vmem:[%s13 + $0x2c] sm:$0xf]
    %v1182 = vld [vmem:[%s13 + $0x30] sm:$0xf]
    %v1183 = vld [vmem:[%s13 + $0x34] sm:$0xf]
    %v1184 = vld [vmem:[%s13 + $0x38] sm:$0xf]
    %v1185 = vld [vmem:[%s13 + $0x3c] sm:$0xf]
    %v1186 = vld [vmem:[%s14] sm:$0x1]
    %v1188 = vlaneseq
    %v1189 = vshrl.u32 %v1188, 7
    %v1190 = vsub.s32 0, %v1189
    %v1191 = vrot.slane %v1186, %v1190
    %v1209 = vunpack.c.l.b16 %v1170
    %v1210 = vunpack.c.l.b16 %v1171
    %v1211 = vunpack.c.l.b16 %v1172
    %v1212 = vunpack.c.l.b16 %v1173
    %v1213 = vunpack.c.l.b16 %v1174
    %v1214 = vunpack.c.l.b16 %v1175
    %v1215 = vunpack.c.l.b16 %v1176
    %v1216 = vunpack.c.l.b16 %v1177
    %v1217 = vunpack.c.l.b16 %v1178
    %v1218 = vunpack.c.l.b16 %v1179
    %v1219 = vunpack.c.l.b16 %v1180
    %v1220 = vunpack.c.l.b16 %v1181
    %v1221 = vunpack.c.l.b16 %v1182
    %v1222 = vunpack.c.l.b16 %v1183
    %v1223 = vunpack.c.l.b16 %v1184
    %v1224 = vunpack.c.l.b16 %v1185
    %v1225 = vpack.c.b16 %v1210, %v1209
    %v1226 = vpack.c.b16 %v1212, %v1211
    %v1227 = vpack.c.b16 %v1214, %v1213
    %v1228 = vpack.c.b16 %v1216, %v1215
    %v1229 = vpack.c.b16 %v1218, %v1217
    %v1230 = vpack.c.b16 %v1220, %v1219
    %v1231 = vpack.c.b16 %v1222, %v1221
    %v1232 = vpack.c.b16 %v1224, %v1223
    %1241 = vmatprep.subr.bf16.mxu0 0
    %1242 = vmatpush1.bf16.msra.mxu0 %v1225
    %1243 = vmatprep.subr.bf16.mxu0 0
    %1244 = vmatpush1.bf16.msra.mxu0 %v1226
    %1245 = vmatprep.subr.bf16.mxu0 0
    %1246 = vmatpush1.bf16.msra.mxu0 %v1227
    %1247 = vmatprep.subr.bf16.mxu0 0
    %1248 = vmatpush1.bf16.msra.mxu0 %v1228
    %1249 = vmatprep.subr.bf16.mxu0 0
    %1250 = vmatpush1.bf16.msra.mxu0 %v1229
    %1251 = vmatprep.subr.bf16.mxu0 0
    %1252 = vmatpush1.bf16.msra.mxu0 %v1230
    %1253 = vmatprep.subr.bf16.mxu0 0
    %1254 = vmatpush1.bf16.msra.mxu0 %v1231
    %1255 = vmatprep.subr.bf16.mxu0 0
    %1256 = vmatpush1.bf16.msra.mxu0 %v1232
    %1257 = vmatprep.subr.bf16.mxu0 0
    %1258 = vmatpush1.bf16.msra.mxu0 0
    %1259 = vmatprep.subr.bf16.mxu0 0
    %1260 = vmatpush1.bf16.msra.mxu0 0
    %1261 = vmatprep.subr.bf16.mxu0 0
    %1262 = vmatpush1.bf16.msra.mxu0 0
    %1263 = vmatprep.subr.bf16.mxu0 0
    %1264 = vmatpush1.bf16.msra.mxu0 0
    %1265 = vmatprep.subr.bf16.mxu0 0
    %1266 = vmatpush1.bf16.msra.mxu0 0
    %1267 = vmatprep.subr.bf16.mxu0 0
    %1268 = vmatpush1.bf16.msra.mxu0 0
    %1269 = vmatprep.subr.bf16.mxu0 0
    %1270 = vmatpush1.bf16.msra.mxu0 0
    %1271 = vmatprep.subr.bf16.mxu0 0
    %1272 = vmatpush1.bf16.msra.mxu0 0
    %1273 = vmatprep.mubr.bf16.mxu0 0
    %1274 = vmatmul.mubr.bf16.gmra.mrb[0].mxu0 %v1169
    %v1275 = vpop.f32.mrb[0].mxu0
    %v1276 = vadd.f32 %v1191, %v1275
    %v1277 = vpop.f32.mrb[0].mxu0
    %v1278 = vpop.f32.mrb[0].mxu0
    %v1279 = vadd.f32 %v1191, %v1278
    %v1280 = vpop.f32.mrb[0].mxu0
    %1281 = vdwg.mxu0
    %v1282 = vmax.f32 %v1276, 0.0
    %v1283 = vmax.f32 %v1279, 0.0
    %v1284 = vpack.c.bf16 %v1283, %v1282
    %v1285 = vld [vmem:[%s15] sm:$0xf]
    %v1286 = vld [vmem:[%s15 + $0x4] sm:$0xf]
    %v1287 = vld [vmem:[%s15 + $0x8] sm:$0xf]
    %v1288 = vld [vmem:[%s15 + $0xc] sm:$0xf]
    %v1289 = vld [vmem:[%s15 + $0x10] sm:$0xf]
    %v1290 = vld [vmem:[%s15 + $0x14] sm:$0xf]
    %v1291 = vld [vmem:[%s15 + $0x18] sm:$0xf]
    %v1292 = vld [vmem:[%s15 + $0x1c] sm:$0xf]
    %v1293 = vld [vmem:[%s16] sm:$0x1]
    %v1295 = vlaneseq
    %v1296 = vshrl.u32 %v1295, 7
    %v1297 = vsub.s32 0, %v1296
    %v1298 = vrot.slane %v1293, %v1297
    %v1308 = vunpack.c.l.b16 %v1285
    %v1309 = vunpack.c.l.b16 %v1286
    %v1310 = vunpack.c.l.b16 %v1287
    %v1311 = vunpack.c.l.b16 %v1288
    %v1312 = vunpack.c.l.b16 %v1289
    %v1313 = vunpack.c.l.b16 %v1290
    %v1314 = vunpack.c.l.b16 %v1291
    %v1315 = vunpack.c.l.b16 %v1292
    %v1316 = vpack.c.b16 %v1309, %v1308
    %v1317 = vpack.c.b16 %v1311, %v1310
    %v1318 = vpack.c.b16 %v1313, %v1312
    %v1319 = vpack.c.b16 %v1315, %v1314
    %v1325 = vsel %vm794, %v1284, 0
    %1327 = vmatprep.subr.bf16.mxu0 0
    %1328 = vmatpush1.bf16.msra.mxu0 %v1316
    %1329 = vmatprep.subr.bf16.mxu0 0
    %1330 = vmatpush1.bf16.msra.mxu0 %v1317
    %1331 = vmatprep.subr.bf16.mxu0 0
    %1332 = vmatpush1.bf16.msra.mxu0 %v1318
    %1333 = vmatprep.subr.bf16.mxu0 0
    %1334 = vmatpush1.bf16.msra.mxu0 %v1319
    %1335 = vmatprep.subr.bf16.mxu0 0
    %1336 = vmatpush1.bf16.msra.mxu0 0
    %1337 = vmatprep.subr.bf16.mxu0 0
    %1338 = vmatpush1.bf16.msra.mxu0 0
    %1339 = vmatprep.subr.bf16.mxu0 0
    %1340 = vmatpush1.bf16.msra.mxu0 0
    %1341 = vmatprep.subr.bf16.mxu0 0
    %1342 = vmatpush1.bf16.msra.mxu0 0
    %1343 = vmatprep.subr.bf16.mxu0 0
    %1344 = vmatpush1.bf16.msra.mxu0 0
    %1345 = vmatprep.subr.bf16.mxu0 0
    %1346 = vmatpush1.bf16.msra.mxu0 0
    %1347 = vmatprep.subr.bf16.mxu0 0
    %1348 = vmatpush1.bf16.msra.mxu0 0
    %1349 = vmatprep.subr.bf16.mxu0 0
    %1350 = vmatpush1.bf16.msra.mxu0 0
    %1351 = vmatprep.subr.bf16.mxu0 0
    %1352 = vmatpush1.bf16.msra.mxu0 0
    %1353 = vmatprep.subr.bf16.mxu0 0
    %1354 = vmatpush1.bf16.msra.mxu0 0
    %1355 = vmatprep.subr.bf16.mxu0 0
    %1356 = vmatpush1.bf16.msra.mxu0 0
    %1357 = vmatprep.subr.bf16.mxu0 0
    %1358 = vmatpush1.bf16.msra.mxu0 0
    %1359 = vmatprep.mubr.bf16.mxu0 0
    %1360 = vmatmul.mubr.bf16.gmra.mrb[0].mxu0 %v1325
    %v1361 = vpop.f32.mrb[0].mxu0
    %v1362 = vadd.f32 %v1298, %v1361
    %v1363 = vpop.f32.mrb[0].mxu0
    %v1364 = vpop.f32.mrb[0].mxu0
    %v1365 = vadd.f32 %v1298, %v1364
    %v1366 = vpop.f32.mrb[0].mxu0
    %1367 = vdwg.mxu0
    %1368 = vst.msk [vmem:[#allocation17] sm:$0xff] %vm794, %v1362
    %1369 = vst.msk [vmem:[#allocation17 + $0x8] sm:$0xff] %vm794, %v1365
    // Predicated region
    $region106: #{tpu_custom_call.1} parent=1 // pred_check
      _
    $region107: #{tpu_custom_call.1} parent=1 // pred_check_branch
      %1371 = sbr.rel (0) target = $region109
    $region108: #{tpu_custom_call.1} parent=1 // pred_region
      %s1373 = ssub.s32 256, 256
      %1374 = vsyncadd [#allocation4], %s1373
      %s1375 = sshll.u32 [#allocation17], 4
      %s1376 = int_to_ptr.vmem [resolvable:$true] %s1375
      %1381 = dma.vmem_to_hbm [thread:$0]  %s1376, 256, %s17, [#allocation4], 128, 128, 8
    $region109: #{tpu_custom_call.1} parent=1 // pred_fallthru
      _
    // Predicated region
    $region110: #{tpu_custom_call.1} parent=1 // pred_check
      _
    $region111: #{tpu_custom_call.1} parent=1 // pred_check_branch
      %1383 = sbr.rel (0) target = $region113
    $region112: #{tpu_custom_call.1} parent=1 // pred_region
      %1384 = dma.done [#allocation4], 256
    $region113: #{tpu_custom_call.1} parent=1 // pred_fallthru
      _
    %1385 = vsyncpa [#allocation3], 1
    %1386 = vsyncpa [#allocation6], 1
    %1387 = vsyncpa [#allocation9], 1
    %1388 = vsyncpa [#allocation12], 1
    %1389 = vsyncpa [#allocation15], 1
    %1390 = vsyncpa [#allocation4], 1

</llo_original>
